<compile_context>
chip_gen: v7x
topology: tpu7x:2x2x1
jax: 0.10.0
libtpu: 0.0.40
codegen_flags: <defaults>
</compile_context>

<pallas_src>
import functools

import jax
import jax.numpy as jnp
from jax.experimental import pallas as pl
from jax.experimental.pallas import tpu as pltpu


_LEAKY_SLOPE = 0.01  # nn.LeakyReLU() default used by the reference module.


def _round_up(x, m):
    return (x + m - 1) // m * m


# ---------------------------------------------------------------------------
# Kernel 1: node projection Wh = h @ W plus logit halves f1 = Wh·a1, f2 = Wh·a2
# ---------------------------------------------------------------------------
def _project_kernel(h_ref, w_ref, a1_ref, a2_ref, wh_ref, f1_ref, f2_ref):
    mxu_dtype = wh_ref.dtype
    wh = jnp.dot(h_ref[...].astype(mxu_dtype), w_ref[...].astype(mxu_dtype),
                 preferred_element_type=jnp.float32)            # [tn, F_pad] f32
    wh_ref[...] = wh.astype(mxu_dtype)
    # VPU broadcast-multiply + XLU lane reduce keeps the MXU free and avoids
    # two tiny 1-column matmul drains per tile.
    f1_ref[...] = jnp.sum(wh * a1_ref[...], axis=-1, keepdims=True)
    f2_ref[...] = jnp.sum(wh * a2_ref[...], axis=-1, keepdims=True)


# ---------------------------------------------------------------------------
# Kernel 2: flash-style attention with online softmax (no [N, N] materialized)
# ---------------------------------------------------------------------------
def _attn_kernel(f1_ref, f2_ref, whk_ref, o_ref, m_sc, l_sc, acc_sc, *, concat):
    kv = pl.program_id(1)

    @pl.when(kv == 0)
    def _():
        m_sc[...] = jnp.full_like(m_sc, -1e30)
        l_sc[...] = jnp.zeros_like(l_sc)
        acc_sc[...] = jnp.zeros_like(acc_sc)

    # e[i, j] = LeakyReLU(f1[i] + f2[j]).  f2 arrives already as a
    # lane-resident [1, tk] row (transposed/masked once in the wrapper),
    # so there is no per-step sublane->lane transpose here.
    e = f1_ref[...] + f2_ref[...]                     # [tq, tk] f32
    e = jnp.where(e > 0, e, _LEAKY_SLOPE * e)

    m_prev = m_sc[...]
    m_new = jnp.maximum(m_prev, jnp.max(e, axis=1, keepdims=True))
    alpha = jnp.exp(m_prev - m_new)
    p = jnp.exp(e - m_new)                            # [tq, tk] f32

    l_sc[...] = alpha * l_sc[...] + jnp.sum(p, axis=1, keepdims=True)
    # TODO(synk): F.dropout(attention) is identity at inference (training=False)
    # and is intentionally omitted (inference semantics).
    acc_sc[...] = alpha * acc_sc[...] + jnp.dot(
        p.astype(whk_ref.dtype), whk_ref[...], preferred_element_type=jnp.float32)
    m_sc[...] = m_new

    @pl.when(kv == pl.num_programs(1) - 1)
    def _():
        out = acc_sc[...] * pl.reciprocal(l_sc[...], approx=True)
        if concat:
            # ELU(alpha=1); clamp the exp argument so the discarded branch
            # never evaluates exp of large positive values.
            out = jnp.where(out > 0, out, jnp.exp(jnp.minimum(out, 0.0)) - 1.0)
        o_ref[...] = out.astype(o_ref.dtype)


# ---------------------------------------------------------------------------
# Wrapper
# ---------------------------------------------------------------------------
@functools.partial(jax.jit, static_argnames=("concat", "mxu_dtype"))
def graph_attention_layer(h, W, a, *, concat=True, mxu_dtype=jnp.bfloat16):
    """Pallas forward for GraphAttentionLayer (inference, no dropout).

    h: [N, in_features], W: [in_features, out_features], a: [2*out_features, 1].
    mxu_dtype: dtype fed to the MXU matmuls (accumulation / softmax stats are
    always f32).  bf16 by default for v6e/v7x throughput.
    """
    h = jnp.asarray(h, jnp.float32)
    W = jnp.asarray(W, jnp.float32)
    a = jnp.asarray(a, jnp.float32)

    N, K = h.shape
    F = W.shape[1]

    # Lane-dense padding (multiples of 128) and node padding to tile sizes.
    K_pad = _round_up(K, 128)
    F_pad = _round_up(F, 128)
    # Tiles sized well below v7x's 64 MiB physical / 32 MiB scoped VMEM:
    # per-step working set is O(tq*tk + tk*F_pad + tq*F_pad), double-buffered.
    if N <= 512:
        n_pad = _round_up(N, 128)
        tk = n_pad
    else:
        n_pad = _round_up(N, 512)
        tk = 512
    tq = 128
    tn = 128  # projection-kernel row tile

    h_p = jnp.pad(h, ((0, n_pad - N), (0, K_pad - K)))
    w_p = jnp.pad(W, ((0, K_pad - K), (0, F_pad - F)))
    a1 = jnp.pad(a[:F, 0], (0, F_pad - F)).reshape(1, F_pad)
    a2 = jnp.pad(a[F:, 0], (0, F_pad - F)).reshape(1, F_pad)

    # --- Kernel 1: Wh (stored in mxu_dtype) + per-node logit halves ----------
    wh, f1, f2_col = pl.pallas_call(
        _project_kernel,
        out_shape=(
            jax.ShapeDtypeStruct((n_pad, F_pad), mxu_dtype),
            jax.ShapeDtypeStruct((n_pad, 1), jnp.float32),
            jax.ShapeDtypeStruct((n_pad, 1), jnp.float32),
        ),
        grid_spec=pltpu.PrefetchScalarGridSpec(
            num_scalar_prefetch=0,
            grid=(n_pad // tn,),
            in_specs=[
                pl.BlockSpec((tn, K_pad), lambda i: (i, 0)),
                pl.BlockSpec((K_pad, F_pad), lambda i: (0, 0)),
                pl.BlockSpec((1, F_pad), lambda i: (0, 0)),
                pl.BlockSpec((1, F_pad), lambda i: (0, 0)),
            ],
            out_specs=[
                pl.BlockSpec((tn, F_pad), lambda i: (i, 0)),
                pl.BlockSpec((tn, 1), lambda i: (i, 0)),
                pl.BlockSpec((tn, 1), lambda i: (i, 0)),
            ],
        ),
        compiler_params=pltpu.CompilerParams(dimension_semantics=("parallel",)),
    )(h_p, w_p, a1, a2)

    # Key-side logits as a lane-resident [1, n_pad] row (one transpose, done
    # once in the wrapper = layout plumbing); padded key columns masked to
    # -1e30 so their softmax weight underflows to exactly 0 in the kernel.
    f2_row = f2_col.reshape(1, n_pad)
    col = jax.lax.broadcasted_iota(jnp.int32, (1, n_pad), 1)
    f2_row = jnp.where(col < N, f2_row, jnp.float32(-1e30))

    # --- Kernel 2: flash-style online-softmax attention -----------------------
    out_p = pl.pallas_call(
        functools.partial(_attn_kernel, concat=concat),
        out_shape=jax.ShapeDtypeStruct((n_pad, F_pad), jnp.float32),
        grid_spec=pltpu.PrefetchScalarGridSpec(
            num_scalar_prefetch=0,
            grid=(n_pad // tq, n_pad // tk),
            in_specs=[
                pl.BlockSpec((tq, 1), lambda qi, ki: (qi, 0)),
                pl.BlockSpec((1, tk), lambda qi, ki: (0, ki)),
                pl.BlockSpec((tk, F_pad), lambda qi, ki: (ki, 0)),
            ],
            out_specs=pl.BlockSpec((tq, F_pad), lambda qi, ki: (qi, 0)),
            scratch_shapes=[
                pltpu.VMEM((tq, 1), jnp.float32),       # running row max
                pltpu.VMEM((tq, 1), jnp.float32),       # running row sum
                pltpu.VMEM((tq, F_pad), jnp.float32),   # output accumulator
            ],
        ),
        compiler_params=pltpu.CompilerParams(
            dimension_semantics=("parallel", "arbitrary")),
    )(f1, f2_row, wh)

    return out_p[:N, :F]


# ---------------------------------------------------------------------------
# Reference / demo
# ---------------------------------------------------------------------------
def _xavier_uniform(key, shape, gain):
    fan_in, fan_out = shape[0], shape[1]
    bound = gain * jnp.sqrt(6.0 / (fan_in + fan_out))
    return jax.random.uniform(key, shape, jnp.float32, -bound, bound)


def _reference(h, W, a, concat=True):
    """Pure-JAX reference mirroring the PyTorch module (eval mode)."""
    wh = h @ W
    _, F = wh.shape
    a1, a2 = a[:F, 0], a[F:, 0]
    e = (wh @ a1)[:, None] + (wh @ a2)[None, :]
    e = jnp.where(e > 0, e, _LEAKY_SLOPE * e)
    attn = jax.nn.softmax(e, axis=1)
    hp = attn @ wh
    if concat:
        return jnp.where(hp > 0, hp, jnp.exp(jnp.minimum(hp, 0.0)) - 1.0)
    return hp


if __name__ == "__main__":
    # Small, module-consistent shapes: N graph nodes, in/out feature dims.
    N, in_features, out_features = 8, 16, 32

    key = jax.random.PRNGKey(0)
    k_h, k_w, k_a = jax.random.split(key, 3)
    h = jax.random.normal(k_h, (N, in_features), jnp.float32)
    W = _xavier_uniform(k_w, (in_features, out_features), gain=1.414)
    a = _xavier_uniform(k_a, (2 * out_features, 1), gain=1.414)

    ref = _reference(h, W, a, concat=True)

    # Default (bf16 MXU inputs, f32 accumulation): loose tolerance for bf16.
    out_bf16 = jax.block_until_ready(graph_attention_layer(h, W, a, concat=True))
    assert out_bf16.shape == (N, out_features)
    assert jnp.allclose(out_bf16, ref, atol=1e-1, rtol=1e-1)

    # f32 MXU path: tight check (only the approx softmax reciprocal differs).
    out_f32 = jax.block_until_ready(
        graph_attention_layer(h, W, a, concat=True, mxu_dtype=jnp.float32))
    assert jnp.allclose(out_f32, ref, atol=1e-2, rtol=1e-2)

    # concat=False branch.
    out_nc = jax.block_until_ready(
        graph_attention_layer(h, W, a, concat=False, mxu_dtype=jnp.float32))
    ref_nc = _reference(h, W, a, concat=False)
    assert jnp.allclose(out_nc, ref_nc, atol=1e-2, rtol=1e-2)

    print("KERNEL_OK")
</pallas_src>

<mosaic_0001>
module attributes {stable_mosaic.version = 11 : i64} {
  func.func @_project_kernel(%arg0: i32, %arg1: memref<128x128xf32, #tpu.memory_space<vmem>>, %arg2: memref<128x128xf32, #tpu.memory_space<vmem>>, %arg3: memref<1x128xf32, #tpu.memory_space<vmem>>, %arg4: memref<1x128xf32, #tpu.memory_space<vmem>>, %arg5: memref<128x128xbf16, #tpu.memory_space<vmem>>, %arg6: memref<128x1xf32, #tpu.memory_space<vmem>>, %arg7: memref<128x1xf32, #tpu.memory_space<vmem>>) attributes {dimension_semantics = [#tpu.dimension_semantics<parallel>], iteration_bounds = array<i64: 1>, scalar_prefetch = 0 : i64, scratch_operands = 0 : i64, tpu.core_type = #tpu.core_type<tc>, window_params = [{transform_indices = @transform_0, window_bounds = array<i64: 128, 128>}, {pipeline_mode = #tpu.pipeline_mode<synchronous>, transform_indices = @transform_1, window_bounds = array<i64: 128, 128>}, {pipeline_mode = #tpu.pipeline_mode<synchronous>, transform_indices = @transform_2, window_bounds = array<i64: 1, 128>}, {pipeline_mode = #tpu.pipeline_mode<synchronous>, transform_indices = @transform_3, window_bounds = array<i64: 1, 128>}, {transform_indices = @transform_4, window_bounds = array<i64: 128, 128>}, {transform_indices = @transform_5, window_bounds = array<i64: 128, 1>}, {transform_indices = @transform_6, window_bounds = array<i64: 128, 1>}]} {
    %c0 = arith.constant 0 : index
    %c0_0 = arith.constant 0 : index
    %0 = vector.load %arg1[%c0, %c0_0] : memref<128x128xf32, #tpu.memory_space<vmem>>, vector<128x128xf32>
    %1 = arith.truncf %0 : vector<128x128xf32> to vector<128x128xbf16>
    %c0_1 = arith.constant 0 : index
    %c0_2 = arith.constant 0 : index
    %2 = vector.load %arg2[%c0_1, %c0_2] : memref<128x128xf32, #tpu.memory_space<vmem>>, vector<128x128xf32>
    %3 = arith.truncf %2 : vector<128x128xf32> to vector<128x128xbf16>
    %cst = arith.constant dense<0.000000e+00> : vector<128x128xf32>
    %4 = tpu.matmul %1, %3, %cst {dimension_numbers = #tpu.dot_dimension_numbers<[1], [0], [0], [1], [0, 0, 1, 1], [], []>} : vector<128x128xbf16>, vector<128x128xbf16>, vector<128x128xf32> -> vector<128x128xf32>
    %5 = arith.truncf %4 : vector<128x128xf32> to vector<128x128xbf16>
    %c0_3 = arith.constant 0 : index
    %c0_4 = arith.constant 0 : index
    %6 = vector.load %arg5[%c0_3, %c0_4] : memref<128x128xbf16, #tpu.memory_space<vmem>>, vector<128x128xbf16>
    tpu.vector_store %arg5[%c0_3, %c0_4], %5 {strides = array<i32>} : memref<128x128xbf16, #tpu.memory_space<vmem>>, vector<128x128xbf16>,
    %c0_5 = arith.constant 0 : index
    %c0_6 = arith.constant 0 : index
    %7 = vector.load %arg3[%c0_5, %c0_6] : memref<1x128xf32, #tpu.memory_space<vmem>>, vector<1x128xf32>
    %8 = vector.broadcast %7 : vector<1x128xf32> to vector<128x128xf32>
    %9 = arith.mulf %4, %8 : vector<128x128xf32>
    %cst_7 = arith.constant dense<0.000000e+00> : vector<128xf32>
    %10 = vector.multi_reduction <add>, %9, %cst_7 [1] : vector<128x128xf32> to vector<128xf32>
    %11 = vector.shape_cast %10 : vector<128xf32> to vector<128x1xf32>
    %c0_8 = arith.constant 0 : index
    %c0_9 = arith.constant 0 : index
    %12 = vector.load %arg6[%c0_8, %c0_9] : memref<128x1xf32, #tpu.memory_space<vmem>>, vector<128x1xf32>
    tpu.vector_store %arg6[%c0_8, %c0_9], %11 {strides = array<i32>} : memref<128x1xf32, #tpu.memory_space<vmem>>, vector<128x1xf32>,
    %c0_10 = arith.constant 0 : index
    %c0_11 = arith.constant 0 : index
    %13 = vector.load %arg4[%c0_10, %c0_11] : memref<1x128xf32, #tpu.memory_space<vmem>>, vector<1x128xf32>
    %14 = vector.broadcast %13 : vector<1x128xf32> to vector<128x128xf32>
    %15 = arith.mulf %4, %14 : vector<128x128xf32>
    %cst_12 = arith.constant dense<0.000000e+00> : vector<128xf32>
    %16 = vector.multi_reduction <add>, %15, %cst_12 [1] : vector<128x128xf32> to vector<128xf32>
    %17 = vector.shape_cast %16 : vector<128xf32> to vector<128x1xf32>
    %c0_13 = arith.constant 0 : index
    %c0_14 = arith.constant 0 : index
    %18 = vector.load %arg7[%c0_13, %c0_14] : memref<128x1xf32, #tpu.memory_space<vmem>>, vector<128x1xf32>
    tpu.vector_store %arg7[%c0_13, %c0_14], %17 {strides = array<i32>} : memref<128x1xf32, #tpu.memory_space<vmem>>, vector<128x1xf32>,
    return
  }
  func.func @transform_0(%arg0: i32) -> (i32, i32) {
    %c0_i32 = arith.constant 0 : i32
    %c0_i32_0 = arith.constant 0 : i32
    return %arg0, %c0_i32 : i32, i32
  }
  func.func @transform_1(%arg0: i32) -> (i32, i32) {
    %c0_i32 = arith.constant 0 : i32
    %c0_i32_0 = arith.constant 0 : i32
    %c0_i32_1 = arith.constant 0 : i32
    return %c0_i32, %c0_i32_0 : i32, i32
  }
  func.func @transform_2(%arg0: i32) -> (i32, i32) {
    %c0_i32 = arith.constant 0 : i32
    %c0_i32_0 = arith.constant 0 : i32
    %c0_i32_1 = arith.constant 0 : i32
    return %c0_i32, %c0_i32_0 : i32, i32
  }
  func.func @transform_3(%arg0: i32) -> (i32, i32) {
    %c0_i32 = arith.constant 0 : i32
    %c0_i32_0 = arith.constant 0 : i32
    %c0_i32_1 = arith.constant 0 : i32
    return %c0_i32, %c0_i32_0 : i32, i32
  }
  func.func @transform_4(%arg0: i32) -> (i32, i32) {
    %c0_i32 = arith.constant 0 : i32
    %c0_i32_0 = arith.constant 0 : i32
    return %arg0, %c0_i32 : i32, i32
  }
  func.func @transform_5(%arg0: i32) -> (i32, i32) {
    %c0_i32 = arith.constant 0 : i32
    %c0_i32_0 = arith.constant 0 : i32
    return %arg0, %c0_i32 : i32, i32
  }
  func.func @transform_6(%arg0: i32) -> (i32, i32) {
    %c0_i32 = arith.constant 0 : i32
    %c0_i32_0 = arith.constant 0 : i32
    return %arg0, %c0_i32 : i32, i32
  }
}

module attributes {stable_mosaic.version = 11 : i64} {
  func.func @_attn_kernel(%arg0: i32, %arg1: i32, %arg2: memref<128x1xf32, #tpu.memory_space<vmem>>, %arg3: memref<1x128xf32, #tpu.memory_space<vmem>>, %arg4: memref<128x128xbf16, #tpu.memory_space<vmem>>, %arg5: memref<128x128xf32, #tpu.memory_space<vmem>>, %arg6: memref<128x1xf32, #tpu.memory_space<vmem>>, %arg7: memref<128x1xf32, #tpu.memory_space<vmem>>, %arg8: memref<128x128xf32, #tpu.memory_space<vmem>>) attributes {dimension_semantics = [#tpu.dimension_semantics<parallel>, #tpu.dimension_semantics<arbitrary>], iteration_bounds = array<i64: 1, 1>, scalar_prefetch = 0 : i64, scratch_operands = 3 : i64, tpu.core_type = #tpu.core_type<tc>, window_params = [{transform_indices = @transform_0, window_bounds = array<i64: 128, 1>}, {transform_indices = @transform_1, window_bounds = array<i64: 1, 128>}, {transform_indices = @transform_2, window_bounds = array<i64: 128, 128>}, {transform_indices = @transform_3, window_bounds = array<i64: 128, 128>}]} {
    %c0_i32 = arith.constant 0 : i32
    %0 = arith.cmpi eq, %arg1, %c0_i32 : i32
    %1 = arith.extui %0 : i1 to i32
    %c0_i32_0 = arith.constant 0 : i32
    %2 = arith.cmpi ne, %1, %c0_i32_0 : i32
    scf.if %2 {
      %cst_24 = arith.constant -1.000000e+30 : f32
      %40 = vector.broadcast %cst_24 : f32 to vector<128x1xf32>
      %c0_25 = arith.constant 0 : index
      %c0_26 = arith.constant 0 : index
      %41 = vector.load %arg6[%c0_25, %c0_26] : memref<128x1xf32, #tpu.memory_space<vmem>>, vector<128x1xf32>
      tpu.vector_store %arg6[%c0_25, %c0_26], %40 {strides = array<i32>} : memref<128x1xf32, #tpu.memory_space<vmem>>, vector<128x1xf32>,
      %cst_27 = arith.constant 0.000000e+00 : f32
      %42 = vector.broadcast %cst_27 : f32 to vector<128x1xf32>
      %c0_28 = arith.constant 0 : index
      %c0_29 = arith.constant 0 : index
      %43 = vector.load %arg7[%c0_28, %c0_29] : memref<128x1xf32, #tpu.memory_space<vmem>>, vector<128x1xf32>
      tpu.vector_store %arg7[%c0_28, %c0_29], %42 {strides = array<i32>} : memref<128x1xf32, #tpu.memory_space<vmem>>, vector<128x1xf32>,
      %cst_30 = arith.constant 0.000000e+00 : f32
      %44 = vector.broadcast %cst_30 : f32 to vector<128x128xf32>
      %c0_31 = arith.constant 0 : index
      %c0_32 = arith.constant 0 : index
      %45 = vector.load %arg8[%c0_31, %c0_32] : memref<128x128xf32, #tpu.memory_space<vmem>>, vector<128x128xf32>
      tpu.vector_store %arg8[%c0_31, %c0_32], %44 {strides = array<i32>} : memref<128x128xf32, #tpu.memory_space<vmem>>, vector<128x128xf32>,
    } else {
    }
    %c0 = arith.constant 0 : index
    %c0_1 = arith.constant 0 : index
    %3 = vector.load %arg2[%c0, %c0_1] : memref<128x1xf32, #tpu.memory_space<vmem>>, vector<128x1xf32>
    %c0_2 = arith.constant 0 : index
    %c0_3 = arith.constant 0 : index
    %4 = vector.load %arg3[%c0_2, %c0_3] : memref<1x128xf32, #tpu.memory_space<vmem>>, vector<1x128xf32>
    %5 = vector.broadcast %3 : vector<128x1xf32> to vector<128x128xf32>
    %6 = vector.broadcast %4 : vector<1x128xf32> to vector<128x128xf32>
    %7 = arith.addf %5, %6 : vector<128x128xf32>
    %cst = arith.constant 0.000000e+00 : f32
    %8 = vector.broadcast %cst : f32 to vector<128x128xf32>
    %9 = arith.cmpf ogt, %7, %8 : vector<128x128xf32>
    %cst_4 = arith.constant 0.00999999977 : f32
    %10 = vector.broadcast %cst_4 : f32 to vector<128x128xf32>
    %11 = arith.mulf %10, %7 : vector<128x128xf32>
    %12 = arith.select %9, %7, %11 : vector<128x128xi1>, vector<128x128xf32>
    %c0_5 = arith.constant 0 : index
    %c0_6 = arith.constant 0 : index
    %13 = vector.load %arg6[%c0_5, %c0_6] : memref<128x1xf32, #tpu.memory_space<vmem>>, vector<128x1xf32>
    %cst_7 = arith.constant dense<0xFF800000> : vector<128xf32>
    %14 = vector.multi_reduction <maximumf>, %12, %cst_7 [1] : vector<128x128xf32> to vector<128xf32>
    %15 = vector.shape_cast %14 : vector<128xf32> to vector<128x1xf32>
    %16 = arith.maximumf %13, %15 : vector<128x1xf32>
    %17 = arith.subf %13, %16 : vector<128x1xf32>
    %18 = math.exp %17 : vector<128x1xf32>
    %19 = vector.broadcast %16 : vector<128x1xf32> to vector<128x128xf32>
    %20 = arith.subf %12, %19 : vector<128x128xf32>
    %21 = math.exp %20 : vector<128x128xf32>
    %c0_8 = arith.constant 0 : index
    %c0_9 = arith.constant 0 : index
    %22 = vector.load %arg7[%c0_8, %c0_9] : memref<128x1xf32, #tpu.memory_space<vmem>>, vector<128x1xf32>
    %23 = arith.mulf %18, %22 : vector<128x1xf32>
    %cst_10 = arith.constant dense<0.000000e+00> : vector<128xf32>
    %24 = vector.multi_reduction <add>, %21, %cst_10 [1] : vector<128x128xf32> to vector<128xf32>
    %25 = vector.shape_cast %24 : vector<128xf32> to vector<128x1xf32>
    %26 = arith.addf %23, %25 : vector<128x1xf32>
    %c0_11 = arith.constant 0 : index
    %c0_12 = arith.constant 0 : index
    %27 = vector.load %arg7[%c0_11, %c0_12] : memref<128x1xf32, #tpu.memory_space<vmem>>, vector<128x1xf32>
    tpu.vector_store %arg7[%c0_11, %c0_12], %26 {strides = array<i32>} : memref<128x1xf32, #tpu.memory_space<vmem>>, vector<128x1xf32>,
    %c0_13 = arith.constant 0 : index
    %c0_14 = arith.constant 0 : index
    %28 = vector.load %arg8[%c0_13, %c0_14] : memref<128x128xf32, #tpu.memory_space<vmem>>, vector<128x128xf32>
    %29 = vector.broadcast %18 : vector<128x1xf32> to vector<128x128xf32>
    %30 = arith.mulf %29, %28 : vector<128x128xf32>
    %31 = arith.truncf %21 : vector<128x128xf32> to vector<128x128xbf16>
    %c0_15 = arith.constant 0 : index
    %c0_16 = arith.constant 0 : index
    %32 = vector.load %arg4[%c0_15, %c0_16] : memref<128x128xbf16, #tpu.memory_space<vmem>>, vector<128x128xbf16>
    %cst_17 = arith.constant dense<0.000000e+00> : vector<128x128xf32>
    %33 = tpu.matmul %31, %32, %cst_17 {dimension_numbers = #tpu.dot_dimension_numbers<[1], [0], [0], [1], [0, 0, 1, 1], [], []>} : vector<128x128xbf16>, vector<128x128xbf16>, vector<128x128xf32> -> vector<128x128xf32>
    %34 = arith.addf %30, %33 : vector<128x128xf32>
    %c0_18 = arith.constant 0 : index
    %c0_19 = arith.constant 0 : index
    %35 = vector.load %arg8[%c0_18, %c0_19] : memref<128x128xf32, #tpu.memory_space<vmem>>, vector<128x128xf32>
    tpu.vector_store %arg8[%c0_18, %c0_19], %34 {strides = array<i32>} : memref<128x128xf32, #tpu.memory_space<vmem>>, vector<128x128xf32>,
    %c0_20 = arith.constant 0 : index
    %c0_21 = arith.constant 0 : index
    %36 = vector.load %arg6[%c0_20, %c0_21] : memref<128x1xf32, #tpu.memory_space<vmem>>, vector<128x1xf32>
    tpu.vector_store %arg6[%c0_20, %c0_21], %16 {strides = array<i32>} : memref<128x1xf32, #tpu.memory_space<vmem>>, vector<128x1xf32>,
    %c0_i32_22 = arith.constant 0 : i32
    %37 = arith.cmpi eq, %arg1, %c0_i32_22 : i32
    %38 = arith.extui %37 : i1 to i32
    %c0_i32_23 = arith.constant 0 : i32
    %39 = arith.cmpi ne, %38, %c0_i32_23 : i32
    scf.if %39 {
      %c0_24 = arith.constant 0 : index
      %c0_25 = arith.constant 0 : index
      %40 = vector.load %arg8[%c0_24, %c0_25] : memref<128x128xf32, #tpu.memory_space<vmem>>, vector<128x128xf32>
      %c0_26 = arith.constant 0 : index
      %c0_27 = arith.constant 0 : index
      %41 = vector.load %arg7[%c0_26, %c0_27] : memref<128x1xf32, #tpu.memory_space<vmem>>, vector<128x1xf32>
      %42 = tpu.reciprocal %41 {approx = true} : vector<128x1xf32> -> vector<128x1xf32>
      %43 = vector.broadcast %42 : vector<128x1xf32> to vector<128x128xf32>
      %44 = arith.mulf %40, %43 : vector<128x128xf32>
      %cst_28 = arith.constant 0.000000e+00 : f32
      %45 = vector.broadcast %cst_28 : f32 to vector<128x128xf32>
      %46 = arith.cmpf ogt, %44, %45 : vector<128x128xf32>
      %cst_29 = arith.constant 0.000000e+00 : f32
      %47 = vector.broadcast %cst_29 : f32 to vector<128x128xf32>
      %48 = arith.minimumf %44, %47 : vector<128x128xf32>
      %49 = math.exp %48 : vector<128x128xf32>
      %cst_30 = arith.constant 1.000000e+00 : f32
      %50 = vector.broadcast %cst_30 : f32 to vector<128x128xf32>
      %51 = arith.subf %49, %50 : vector<128x128xf32>
      %52 = arith.select %46, %44, %51 : vector<128x128xi1>, vector<128x128xf32>
      %c0_31 = arith.constant 0 : index
      %c0_32 = arith.constant 0 : index
      %53 = vector.load %arg5[%c0_31, %c0_32] : memref<128x128xf32, #tpu.memory_space<vmem>>, vector<128x128xf32>
      tpu.vector_store %arg5[%c0_31, %c0_32], %52 {strides = array<i32>} : memref<128x128xf32, #tpu.memory_space<vmem>>, vector<128x128xf32>,
    } else {
    }
    return
  }
  func.func @transform_0(%arg0: i32, %arg1: i32) -> (i32, i32) {
    %c0_i32 = arith.constant 0 : i32
    %c0_i32_0 = arith.constant 0 : i32
    return %arg0, %c0_i32 : i32, i32
  }
  func.func @transform_1(%arg0: i32, %arg1: i32) -> (i32, i32) {
    %c0_i32 = arith.constant 0 : i32
    %c0_i32_0 = arith.constant 0 : i32
    return %c0_i32, %arg1 : i32, i32
  }
  func.func @transform_2(%arg0: i32, %arg1: i32) -> (i32, i32) {
    %c0_i32 = arith.constant 0 : i32
    %c0_i32_0 = arith.constant 0 : i32
    return %arg1, %c0_i32 : i32, i32
  }
  func.func @transform_3(%arg0: i32, %arg1: i32) -> (i32, i32) {
    %c0_i32 = arith.constant 0 : i32
    %c0_i32_0 = arith.constant 0 : i32
    return %arg0, %c0_i32 : i32, i32
  }
}

</mosaic_0001>

<llo_original>
// kernel: graph_attention_layer.2
$region0: #{graph_attention_layer.2}
  #allocation0 [shape = 'u32[]', space=smem, size = 0x4, offset = 0x4, fixed_abs, tag = 'smem constant byte address 0x4 - core index']
  #allocation1 [shape = 'u32[144,128]{1,0:T(1,128)}', space=vmem, size = 0x12000, scoped, tag = 'internal scratch']
  %s0 = inlined_call_operand.vmem [shape: f32[128,128], index: 0, kind: input, shape index: {}]
  %s1 = inlined_call_operand.vmem [shape: f32[128,128], index: 1, kind: input, shape index: {}]
  %s2 = inlined_call_operand.vmem [shape: f32[1,128], index: 2, kind: input, shape index: {}]
  %s3 = inlined_call_operand.vmem [shape: f32[1,128], index: 3, kind: input, shape index: {}]
  %s4 = inlined_call_operand.vmem [shape: bf16[128,128], index: 4, kind: output, shape index: {0}]
  %s5 = inlined_call_operand.vmem [shape: f32[128,1], index: 5, kind: output, shape index: {1}]
  %s6 = inlined_call_operand.vmem [shape: f32[128,1], index: 6, kind: output, shape index: {2}]
  %7 = xla_tuple %s4, %s5, %s6
  %s8 = sld [smem:[#allocation0]]
  $region42: #{graph_attention_layer.2} parent=0
    _
  %s10 = ssub.s32 1, %s8
  %s11 = scalar_select 0, %s10, %s8
  // Predicated region
  $region2: #{graph_attention_layer.2} parent=0 // pred_check
    _
  $region3: #{graph_attention_layer.2} parent=0 // pred_check_branch
    %13 = sbr.rel (0) target = $region5
  $region4: #{graph_attention_layer.2} parent=0 // pred_region
    _
  $region5: #{graph_attention_layer.2} parent=0 // pred_fallthru
    _
  // Predicated region
  $region6: #{graph_attention_layer.2} parent=0 // pred_check
    _
  $region7: #{graph_attention_layer.2} parent=0 // pred_check_branch
    %15 = sbr.rel (0) target = $region9
  $region8: #{graph_attention_layer.2} parent=0 // pred_region
    _
  $region9: #{graph_attention_layer.2} parent=0 // pred_fallthru
    _
  // Predicated region
  $region10: #{graph_attention_layer.2} parent=0 // pred_check
    _
  $region11: #{graph_attention_layer.2} parent=0 // pred_check_branch
    %17 = sbr.rel (0) target = $region13
  $region12: #{graph_attention_layer.2} parent=0 // pred_region
    _
  $region13: #{graph_attention_layer.2} parent=0 // pred_fallthru
    _
  // Predicated region
  $region14: #{graph_attention_layer.2} parent=0 // pred_check
    _
  $region15: #{graph_attention_layer.2} parent=0 // pred_check_branch
    %19 = sbr.rel (0) target = $region17
  $region16: #{graph_attention_layer.2} parent=0 // pred_region
    _
  $region17: #{graph_attention_layer.2} parent=0 // pred_fallthru
    _
  %v21 = vld [vmem:[%s0] sm:$0xff]
  %v22 = vld [vmem:[%s0 + $0x8] sm:$0xff]
  %v23 = vld [vmem:[%s0 + $0x10] sm:$0xff]
  %v24 = vld [vmem:[%s0 + $0x18] sm:$0xff]
  %v25 = vld [vmem:[%s0 + $0x20] sm:$0xff]
  %v26 = vld [vmem:[%s0 + $0x28] sm:$0xff]
  %v27 = vld [vmem:[%s0 + $0x30] sm:$0xff]
  %v28 = vld [vmem:[%s0 + $0x38] sm:$0xff]
  %v29 = vld [vmem:[%s0 + $0x40] sm:$0xff]
  %v30 = vld [vmem:[%s0 + $0x48] sm:$0xff]
  %v31 = vld [vmem:[%s0 + $0x50] sm:$0xff]
  %v32 = vld [vmem:[%s0 + $0x58] sm:$0xff]
  %v33 = vld [vmem:[%s0 + $0x60] sm:$0xff]
  %v34 = vld [vmem:[%s0 + $0x68] sm:$0xff]
  %v35 = vld [vmem:[%s0 + $0x70] sm:$0xff]
  %v36 = vld [vmem:[%s0 + $0x78] sm:$0xff]
  %v37 = vpack.c.bf16 %v22, %v21
  %v38 = vpack.c.bf16 %v24, %v23
  %v39 = vpack.c.bf16 %v26, %v25
  %v40 = vpack.c.bf16 %v28, %v27
  %v41 = vpack.c.bf16 %v30, %v29
  %v42 = vpack.c.bf16 %v32, %v31
  %v43 = vpack.c.bf16 %v34, %v33
  %v44 = vpack.c.bf16 %v36, %v35
  %v45 = vld [vmem:[%s1] sm:$0xff]
  %v46 = vld [vmem:[%s1 + $0x8] sm:$0xff]
  %v47 = vld [vmem:[%s1 + $0x10] sm:$0xff]
  %v48 = vld [vmem:[%s1 + $0x18] sm:$0xff]
  %v49 = vld [vmem:[%s1 + $0x20] sm:$0xff]
  %v50 = vld [vmem:[%s1 + $0x28] sm:$0xff]
  %v51 = vld [vmem:[%s1 + $0x30] sm:$0xff]
  %v52 = vld [vmem:[%s1 + $0x38] sm:$0xff]
  %v53 = vld [vmem:[%s1 + $0x40] sm:$0xff]
  %v54 = vld [vmem:[%s1 + $0x48] sm:$0xff]
  %v55 = vld [vmem:[%s1 + $0x50] sm:$0xff]
  %v56 = vld [vmem:[%s1 + $0x58] sm:$0xff]
  %v57 = vld [vmem:[%s1 + $0x60] sm:$0xff]
  %v58 = vld [vmem:[%s1 + $0x68] sm:$0xff]
  %v59 = vld [vmem:[%s1 + $0x70] sm:$0xff]
  %v60 = vld [vmem:[%s1 + $0x78] sm:$0xff]
  %v61 = vpack.c.bf16 %v46, %v45
  %v62 = vpack.c.bf16 %v48, %v47
  %v63 = vpack.c.bf16 %v50, %v49
  %v64 = vpack.c.bf16 %v52, %v51
  %v65 = vpack.c.bf16 %v54, %v53
  %v66 = vpack.c.bf16 %v56, %v55
  %v67 = vpack.c.bf16 %v58, %v57
  %v68 = vpack.c.bf16 %v60, %v59
  %69 = vmatprep.subr.bf16.mxu0 0
  %70 = vmatpush1.bf16.msra.mxu0 %v61
  %71 = vmatprep.subr.bf16.mxu0 0
  %72 = vmatpush1.bf16.msra.mxu0 %v62
  %73 = vmatprep.subr.bf16.mxu0 0
  %74 = vmatpush1.bf16.msra.mxu0 %v63
  %75 = vmatprep.subr.bf16.mxu0 0
  %76 = vmatpush1.bf16.msra.mxu0 %v64
  %77 = vmatprep.subr.bf16.mxu0 0
  %78 = vmatpush1.bf16.msra.mxu0 %v65
  %79 = vmatprep.subr.bf16.mxu0 0
  %80 = vmatpush1.bf16.msra.mxu0 %v66
  %81 = vmatprep.subr.bf16.mxu0 0
  %82 = vmatpush1.bf16.msra.mxu0 %v67
  %83 = vmatprep.subr.bf16.mxu0 0
  %84 = vmatpush1.bf16.msra.mxu0 %v68
  %85 = vmatprep.subr.bf16.mxu0 0
  %86 = vmatpush1.bf16.msra.mxu0 0
  %87 = vmatprep.subr.bf16.mxu0 0
  %88 = vmatpush1.bf16.msra.mxu0 0
  %89 = vmatprep.subr.bf16.mxu0 0
  %90 = vmatpush1.bf16.msra.mxu0 0
  %91 = vmatprep.subr.bf16.mxu0 0
  %92 = vmatpush1.bf16.msra.mxu0 0
  %93 = vmatprep.subr.bf16.mxu0 0
  %94 = vmatpush1.bf16.msra.mxu0 0
  %95 = vmatprep.subr.bf16.mxu0 0
  %96 = vmatpush1.bf16.msra.mxu0 0
  %97 = vmatprep.subr.bf16.mxu0 0
  %98 = vmatpush1.bf16.msra.mxu0 0
  %99 = vmatprep.subr.bf16.mxu0 0
  %100 = vmatpush1.bf16.msra.mxu0 0
  %101 = vmatprep.mubr.bf16.mxu0 0
  %102 = vmatmul.mubr.bf16.gmra.mrb[0].mxu0 %v37
  %v103 = vpop.f32.mrb[0].mxu0
  %v104 = vadd.f32 0.0, %v103
  %v105 = vpop.f32.mrb[0].mxu0
  %v106 = vpop.f32.mrb[0].mxu0
  %v107 = vadd.f32 0.0, %v106
  %v108 = vpop.f32.mrb[0].mxu0
  %109 = vmatprep.mubr.bf16.mxu0 0
  %110 = vmatmul.mubr.bf16.gmra.mrb[0].mxu0 %v38
  %v111 = vpop.f32.mrb[0].mxu0
  %v112 = vadd.f32 0.0, %v111
  %v113 = vpop.f32.mrb[0].mxu0
  %v114 = vpop.f32.mrb[0].mxu0
  %v115 = vadd.f32 0.0, %v114
  %v116 = vpop.f32.mrb[0].mxu0
  %117 = vmatprep.mubr.bf16.mxu0 0
  %118 = vmatmul.mubr.bf16.gmra.mrb[0].mxu0 %v39
  %v119 = vpop.f32.mrb[0].mxu0
  %v120 = vadd.f32 0.0, %v119
  %v121 = vpop.f32.mrb[0].mxu0
  %v122 = vpop.f32.mrb[0].mxu0
  %v123 = vadd.f32 0.0, %v122
  %v124 = vpop.f32.mrb[0].mxu0
  %125 = vmatprep.mubr.bf16.mxu0 0
  %126 = vmatmul.mubr.bf16.gmra.mrb[0].mxu0 %v40
  %v127 = vpop.f32.mrb[0].mxu0
  %v128 = vadd.f32 0.0, %v127
  %v129 = vpop.f32.mrb[0].mxu0
  %v130 = vpop.f32.mrb[0].mxu0
  %v131 = vadd.f32 0.0, %v130
  %v132 = vpop.f32.mrb[0].mxu0
  %133 = vmatprep.mubr.bf16.mxu0 0
  %134 = vmatmul.mubr.bf16.gmra.mrb[0].mxu0 %v41
  %v135 = vpop.f32.mrb[0].mxu0
  %v136 = vadd.f32 0.0, %v135
  %v137 = vpop.f32.mrb[0].mxu0
  %v138 = vpop.f32.mrb[0].mxu0
  %v139 = vadd.f32 0.0, %v138
  %v140 = vpop.f32.mrb[0].mxu0
  %141 = vmatprep.mubr.bf16.mxu0 0
  %142 = vmatmul.mubr.bf16.gmra.mrb[0].mxu0 %v42
  %v143 = vpop.f32.mrb[0].mxu0
  %v144 = vadd.f32 0.0, %v143
  %v145 = vpop.f32.mrb[0].mxu0
  %v146 = vpop.f32.mrb[0].mxu0
  %v147 = vadd.f32 0.0, %v146
  %v148 = vpop.f32.mrb[0].mxu0
  %149 = vmatprep.mubr.bf16.mxu0 0
  %150 = vmatmul.mubr.bf16.gmra.mrb[0].mxu0 %v43
  %v151 = vpop.f32.mrb[0].mxu0
  %v152 = vadd.f32 0.0, %v151
  %v153 = vpop.f32.mrb[0].mxu0
  %v154 = vpop.f32.mrb[0].mxu0
  %v155 = vadd.f32 0.0, %v154
  %v156 = vpop.f32.mrb[0].mxu0
  %157 = vmatprep.mubr.bf16.mxu0 0
  %158 = vmatmul.mubr.bf16.gmra.mrb[0].mxu0 %v44
  %v159 = vpop.f32.mrb[0].mxu0
  %v160 = vadd.f32 0.0, %v159
  %v161 = vpop.f32.mrb[0].mxu0
  %v162 = vpop.f32.mrb[0].mxu0
  %v163 = vadd.f32 0.0, %v162
  %v164 = vpop.f32.mrb[0].mxu0
  %165 = vdwg.mxu0
  %v166 = vpack.c.bf16 %v107, %v104
  %v167 = vpack.c.bf16 %v115, %v112
  %v168 = vpack.c.bf16 %v123, %v120
  %v169 = vpack.c.bf16 %v131, %v128
  %v170 = vpack.c.bf16 %v139, %v136
  %v171 = vpack.c.bf16 %v147, %v144
  %v172 = vpack.c.bf16 %v155, %v152
  %v173 = vpack.c.bf16 %v163, %v160
  %v182 = vunpack.c.l.b16 %v166
  %v183 = vunpack.c.h.b16 %v166
  %v184 = vunpack.c.l.b16 %v167
  %v185 = vunpack.c.h.b16 %v167
  %v186 = vunpack.c.l.b16 %v168
  %v187 = vunpack.c.h.b16 %v168
  %v188 = vunpack.c.l.b16 %v169
  %v189 = vunpack.c.h.b16 %v169
  %v190 = vunpack.c.l.b16 %v170
  %v191 = vunpack.c.h.b16 %v170
  %v192 = vunpack.c.l.b16 %v171
  %v193 = vunpack.c.h.b16 %v171
  %v194 = vunpack.c.l.b16 %v172
  %v195 = vunpack.c.h.b16 %v172
  %v196 = vunpack.c.l.b16 %v173
  %v197 = vunpack.c.h.b16 %v173
  %v198 = vpack.c.b16 %v182, %v182
  %v199 = vpack.c.b16 %v183, %v183
  %v200 = vpack.c.b16 %v184, %v184
  %v201 = vpack.c.b16 %v185, %v185
  %v202 = vpack.c.b16 %v186, %v186
  %v203 = vpack.c.b16 %v187, %v187
  %v204 = vpack.c.b16 %v188, %v188
  %v205 = vpack.c.b16 %v189, %v189
  %v206 = vpack.c.b16 %v190, %v190
  %v207 = vpack.c.b16 %v191, %v191
  %v208 = vpack.c.b16 %v192, %v192
  %v209 = vpack.c.b16 %v193, %v193
  %v210 = vpack.c.b16 %v194, %v194
  %v211 = vpack.c.b16 %v195, %v195
  %v212 = vpack.c.b16 %v196, %v196
  %v213 = vpack.c.b16 %v197, %v197
  %230 = vst [vmem:[%s4] sm:$0xf] %v198
  %231 = vst [vmem:[%s4 + $0x4] sm:$0xf] %v199
  %232 = vst [vmem:[%s4 + $0x8] sm:$0xf] %v200
  %233 = vst [vmem:[%s4 + $0xc] sm:$0xf] %v201
  %234 = vst [vmem:[%s4 + $0x10] sm:$0xf] %v202
  %235 = vst [vmem:[%s4 + $0x14] sm:$0xf] %v203
  %236 = vst [vmem:[%s4 + $0x18] sm:$0xf] %v204
  %237 = vst [vmem:[%s4 + $0x1c] sm:$0xf] %v205
  %238 = vst [vmem:[%s4 + $0x20] sm:$0xf] %v206
  %239 = vst [vmem:[%s4 + $0x24] sm:$0xf] %v207
  %240 = vst [vmem:[%s4 + $0x28] sm:$0xf] %v208
  %241 = vst [vmem:[%s4 + $0x2c] sm:$0xf] %v209
  %242 = vst [vmem:[%s4 + $0x30] sm:$0xf] %v210
  %243 = vst [vmem:[%s4 + $0x34] sm:$0xf] %v211
  %244 = vst [vmem:[%s4 + $0x38] sm:$0xf] %v212
  %245 = vst [vmem:[%s4 + $0x3c] sm:$0xf] %v213
  %v246 = vld [vmem:[%s2] sm:$0x1]
  %v248 = vlaneseq
  %v249 = vshrl.u32 %v248, 7
  %v250 = vsub.s32 0, %v249
  %v251 = vrot.slane %v246, %v250
  %v253 = vmul.f32 %v104, %v251
  %v254 = vmul.f32 %v107, %v251
  %v255 = vmul.f32 %v112, %v251
  %v256 = vmul.f32 %v115, %v251
  %v257 = vmul.f32 %v120, %v251
  %v258 = vmul.f32 %v123, %v251
  %v259 = vmul.f32 %v128, %v251
  %v260 = vmul.f32 %v131, %v251
  %v261 = vmul.f32 %v136, %v251
  %v262 = vmul.f32 %v139, %v251
  %v263 = vmul.f32 %v144, %v251
  %v264 = vmul.f32 %v147, %v251
  %v265 = vmul.f32 %v152, %v251
  %v266 = vmul.f32 %v155, %v251
  %v267 = vmul.f32 %v160, %v251
  %v268 = vmul.f32 %v163, %v251
  %269 = vadd.xlane.f32.xlu0 %v253
  %v270 = vpop.xlane.xlu0 %269
  %271 = vadd.xlane.f32.xlu0 %v254
  %v272 = vpop.xlane.xlu0 %271
  %273 = vadd.xlane.f32.xlu0 %v255
  %v274 = vpop.xlane.xlu0 %273
  %275 = vadd.xlane.f32.xlu0 %v256
  %v276 = vpop.xlane.xlu0 %275
  %277 = vadd.xlane.f32.xlu0 %v257
  %v278 = vpop.xlane.xlu0 %277
  %279 = vadd.xlane.f32.xlu0 %v258
  %v280 = vpop.xlane.xlu0 %279
  %281 = vadd.xlane.f32.xlu0 %v259
  %v282 = vpop.xlane.xlu0 %281
  %283 = vadd.xlane.f32.xlu0 %v260
  %v284 = vpop.xlane.xlu0 %283
  %285 = vadd.xlane.f32.xlu0 %v261
  %v286 = vpop.xlane.xlu0 %285
  %287 = vadd.xlane.f32.xlu0 %v262
  %v288 = vpop.xlane.xlu0 %287
  %289 = vadd.xlane.f32.xlu0 %v263
  %v290 = vpop.xlane.xlu0 %289
  %291 = vadd.xlane.f32.xlu0 %v264
  %v292 = vpop.xlane.xlu0 %291
  %293 = vadd.xlane.f32.xlu0 %v265
  %v294 = vpop.xlane.xlu0 %293
  %295 = vadd.xlane.f32.xlu0 %v266
  %v296 = vpop.xlane.xlu0 %295
  %297 = vadd.xlane.f32.xlu0 %v267
  %v298 = vpop.xlane.xlu0 %297
  %299 = vadd.xlane.f32.xlu0 %v268
  %v300 = vpop.xlane.xlu0 %299
  %vm301 = vcmask 7168
  %302 = vst.msk [vmem:[%s5] sm:$0xff] %vm301, %v270
  %303 = vst.msk [vmem:[%s5 + $0x8] sm:$0xff] %vm301, %v272
  %304 = vst.msk [vmem:[%s5 + $0x10] sm:$0xff] %vm301, %v274
  %305 = vst.msk [vmem:[%s5 + $0x18] sm:$0xff] %vm301, %v276
  %306 = vst.msk [vmem:[%s5 + $0x20] sm:$0xff] %vm301, %v278
  %307 = vst.msk [vmem:[%s5 + $0x28] sm:$0xff] %vm301, %v280
  %308 = vst.msk [vmem:[%s5 + $0x30] sm:$0xff] %vm301, %v282
  %309 = vst.msk [vmem:[%s5 + $0x38] sm:$0xff] %vm301, %v284
  %310 = vst.msk [vmem:[%s5 + $0x40] sm:$0xff] %vm301, %v286
  %311 = vst.msk [vmem:[%s5 + $0x48] sm:$0xff] %vm301, %v288
  %312 = vst.msk [vmem:[%s5 + $0x50] sm:$0xff] %vm301, %v290
  %313 = vst.msk [vmem:[%s5 + $0x58] sm:$0xff] %vm301, %v292
  %314 = vst.msk [vmem:[%s5 + $0x60] sm:$0xff] %vm301, %v294
  %315 = vst.msk [vmem:[%s5 + $0x68] sm:$0xff] %vm301, %v296
  %316 = vst.msk [vmem:[%s5 + $0x70] sm:$0xff] %vm301, %v298
  %317 = vst.msk [vmem:[%s5 + $0x78] sm:$0xff] %vm301, %v300
  %v318 = vld [vmem:[%s3] sm:$0x1]
  %v320 = vlaneseq
  %v321 = vshrl.u32 %v320, 7
  %v322 = vsub.s32 0, %v321
  %v323 = vrot.slane %v318, %v322
  %v325 = vmul.f32 %v104, %v323
  %v326 = vmul.f32 %v107, %v323
  %v327 = vmul.f32 %v112, %v323
  %v328 = vmul.f32 %v115, %v323
  %v329 = vmul.f32 %v120, %v323
  %v330 = vmul.f32 %v123, %v323
  %v331 = vmul.f32 %v128, %v323
  %v332 = vmul.f32 %v131, %v323
  %v333 = vmul.f32 %v136, %v323
  %v334 = vmul.f32 %v139, %v323
  %v335 = vmul.f32 %v144, %v323
  %v336 = vmul.f32 %v147, %v323
  %v337 = vmul.f32 %v152, %v323
  %v338 = vmul.f32 %v155, %v323
  %v339 = vmul.f32 %v160, %v323
  %v340 = vmul.f32 %v163, %v323
  %341 = vadd.xlane.f32.xlu0 %v325
  %v342 = vpop.xlane.xlu0 %341
  %343 = vadd.xlane.f32.xlu0 %v326
  %v344 = vpop.xlane.xlu0 %343
  %345 = vadd.xlane.f32.xlu0 %v327
  %v346 = vpop.xlane.xlu0 %345
  %347 = vadd.xlane.f32.xlu0 %v328
  %v348 = vpop.xlane.xlu0 %347
  %349 = vadd.xlane.f32.xlu0 %v329
  %v350 = vpop.xlane.xlu0 %349
  %351 = vadd.xlane.f32.xlu0 %v330
  %v352 = vpop.xlane.xlu0 %351
  %353 = vadd.xlane.f32.xlu0 %v331
  %v354 = vpop.xlane.xlu0 %353
  %355 = vadd.xlane.f32.xlu0 %v332
  %v356 = vpop.xlane.xlu0 %355
  %357 = vadd.xlane.f32.xlu0 %v333
  %v358 = vpop.xlane.xlu0 %357
  %359 = vadd.xlane.f32.xlu0 %v334
  %v360 = vpop.xlane.xlu0 %359
  %361 = vadd.xlane.f32.xlu0 %v335
  %v362 = vpop.xlane.xlu0 %361
  %363 = vadd.xlane.f32.xlu0 %v336
  %v364 = vpop.xlane.xlu0 %363
  %365 = vadd.xlane.f32.xlu0 %v337
  %v366 = vpop.xlane.xlu0 %365
  %367 = vadd.xlane.f32.xlu0 %v338
  %v368 = vpop.xlane.xlu0 %367
  %369 = vadd.xlane.f32.xlu0 %v339
  %v370 = vpop.xlane.xlu0 %369
  %371 = vadd.xlane.f32.xlu0 %v340
  %v372 = vpop.xlane.xlu0 %371
  %373 = vst.msk [vmem:[%s6] sm:$0xff] %vm301, %v342
  %374 = vst.msk [vmem:[%s6 + $0x8] sm:$0xff] %vm301, %v344
  %375 = vst.msk [vmem:[%s6 + $0x10] sm:$0xff] %vm301, %v346
  %376 = vst.msk [vmem:[%s6 + $0x18] sm:$0xff] %vm301, %v348
  %377 = vst.msk [vmem:[%s6 + $0x20] sm:$0xff] %vm301, %v350
  %378 = vst.msk [vmem:[%s6 + $0x28] sm:$0xff] %vm301, %v352
  %379 = vst.msk [vmem:[%s6 + $0x30] sm:$0xff] %vm301, %v354
  %380 = vst.msk [vmem:[%s6 + $0x38] sm:$0xff] %vm301, %v356
  %381 = vst.msk [vmem:[%s6 + $0x40] sm:$0xff] %vm301, %v358
  %382 = vst.msk [vmem:[%s6 + $0x48] sm:$0xff] %vm301, %v360
  %383 = vst.msk [vmem:[%s6 + $0x50] sm:$0xff] %vm301, %v362
  %384 = vst.msk [vmem:[%s6 + $0x58] sm:$0xff] %vm301, %v364
  %385 = vst.msk [vmem:[%s6 + $0x60] sm:$0xff] %vm301, %v366
  %386 = vst.msk [vmem:[%s6 + $0x68] sm:$0xff] %vm301, %v368
  %387 = vst.msk [vmem:[%s6 + $0x70] sm:$0xff] %vm301, %v370
  %388 = vst.msk [vmem:[%s6 + $0x78] sm:$0xff] %vm301, %v372
  // Predicated region
  $region18: #{graph_attention_layer.2} parent=0 // pred_check
    _
  $region19: #{graph_attention_layer.2} parent=0 // pred_check_branch
    %390 = sbr.rel (0) target = $region21
  $region20: #{graph_attention_layer.2} parent=0 // pred_region
    _
  $region21: #{graph_attention_layer.2} parent=0 // pred_fallthru
    _
  // Predicated region
  $region22: #{graph_attention_layer.2} parent=0 // pred_check
    _
  $region23: #{graph_attention_layer.2} parent=0 // pred_check_branch
    %392 = sbr.rel (0) target = $region25
  $region24: #{graph_attention_layer.2} parent=0 // pred_region
    _
  $region25: #{graph_attention_layer.2} parent=0 // pred_fallthru
    _
  // Predicated region
  $region26: #{graph_attention_layer.2} parent=0 // pred_check
    _
  $region27: #{graph_attention_layer.2} parent=0 // pred_check_branch
    %394 = sbr.rel (0) target = $region29
  $region28: #{graph_attention_layer.2} parent=0 // pred_region
    _
  $region29: #{graph_attention_layer.2} parent=0 // pred_fallthru
    _
  // Predicated region
  $region30: #{graph_attention_layer.2} parent=0 // pred_check
    _
  $region31: #{graph_attention_layer.2} parent=0 // pred_check_branch
    %396 = sbr.rel (0) target = $region33
  $region32: #{graph_attention_layer.2} parent=0 // pred_region
    _
  $region33: #{graph_attention_layer.2} parent=0 // pred_fallthru
    _
  // Predicated region
  $region34: #{graph_attention_layer.2} parent=0 // pred_check
    _
  $region35: #{graph_attention_layer.2} parent=0 // pred_check_branch
    %398 = sbr.rel (0) target = $region37
  $region36: #{graph_attention_layer.2} parent=0 // pred_region
    _
  $region37: #{graph_attention_layer.2} parent=0 // pred_fallthru
    _
  // Predicated region
  $region38: #{graph_attention_layer.2} parent=0 // pred_check
    _
  $region39: #{graph_attention_layer.2} parent=0 // pred_check_branch
    %400 = sbr.rel (0) target = $region41
  $region40: #{graph_attention_layer.2} parent=0 // pred_region
    _
  $region41: #{graph_attention_layer.2} parent=0 // pred_fallthru
    _

// kernel: graph_attention_layer.3
$region0: #{graph_attention_layer.3}
  #allocation0 [shape = 'u32[]', space=smem, size = 0x4, offset = 0x4, fixed_abs, tag = 'smem constant byte address 0x4 - core index']
  #allocation1 [shape = 'u32[144,128]{1,0:T(1,128)}', space=vmem, size = 0x12000, scoped, tag = 'internal scratch']
  #allocation2 [shape = 'f32[128,1]{1,0:T(8,128)}', space=vmem, size = 0x10000, scoped, tag = 'scratch operand']
  #allocation3 [shape = 'f32[128,1]{1,0:T(8,128)}', space=vmem, size = 0x10000, scoped, tag = 'scratch operand']
  #allocation4 [shape = 'f32[128,128]{1,0:T(8,128)}', space=vmem, size = 0x10000, scoped, tag = 'scratch operand']
  %s0 = inlined_call_operand.vmem [shape: f32[128,1], index: 0, kind: input, shape index: {}]
  %s1 = inlined_call_operand.vmem [shape: f32[1,128], index: 1, kind: input, shape index: {}]
  %s2 = inlined_call_operand.vmem [shape: bf16[128,128], index: 2, kind: input, shape index: {}]
  %s3 = inlined_call_operand.vmem [shape: f32[128,128], index: 3, kind: output, shape index: {}]
  %s4 = sld [smem:[#allocation0]]
  $region30: #{graph_attention_layer.3} parent=0
    _
  %s6 = ssub.s32 1, %s4
  %s7 = scalar_select 0, %s6, %s4
  // Predicated region
  $region2: #{graph_attention_layer.3} parent=0 // pred_check
    _
  $region3: #{graph_attention_layer.3} parent=0 // pred_check_branch
    %9 = sbr.rel (0) target = $region5
  $region4: #{graph_attention_layer.3} parent=0 // pred_region
    _
  $region5: #{graph_attention_layer.3} parent=0 // pred_fallthru
    _
  // Predicated region
  $region6: #{graph_attention_layer.3} parent=0 // pred_check
    _
  $region7: #{graph_attention_layer.3} parent=0 // pred_check_branch
    %11 = sbr.rel (0) target = $region9
  $region8: #{graph_attention_layer.3} parent=0 // pred_region
    _
  $region9: #{graph_attention_layer.3} parent=0 // pred_fallthru
    _
  // Predicated region
  $region10: #{graph_attention_layer.3} parent=0 // pred_check
    _
  $region11: #{graph_attention_layer.3} parent=0 // pred_check_branch
    %13 = sbr.rel (0) target = $region13
  $region12: #{graph_attention_layer.3} parent=0 // pred_region
    _
  $region13: #{graph_attention_layer.3} parent=0 // pred_fallthru
    _
  %p15 = scmp.eq.s32.totalorder 0, 0
  // Predicated region
  $region14: #{graph_attention_layer.3} parent=0 // pred_check
    %p16 = pneg %p15
  $region15: #{graph_attention_layer.3} parent=0 // pred_check_branch
    %18 = sbr.rel (%p16) target = $region17
  $region16: #{graph_attention_layer.3} parent=0 // pred_region
    %vm19 = vcmask 7168
    %20 = vst.msk [vmem:[#allocation2] sm:$0xff] %vm19, -1e+30
    %21 = vst.msk [vmem:[#allocation2 + $0x8] sm:$0xff] %vm19, -1e+30
    %22 = vst.msk [vmem:[#allocation2 + $0x10] sm:$0xff] %vm19, -1e+30
    %23 = vst.msk [vmem:[#allocation2 + $0x18] sm:$0xff] %vm19, -1e+30
    %24 = vst.msk [vmem:[#allocation2 + $0x20] sm:$0xff] %vm19, -1e+30
    %25 = vst.msk [vmem:[#allocation2 + $0x28] sm:$0xff] %vm19, -1e+30
    %26 = vst.msk [vmem:[#allocation2 + $0x30] sm:$0xff] %vm19, -1e+30
    %27 = vst.msk [vmem:[#allocation2 + $0x38] sm:$0xff] %vm19, -1e+30
    %28 = vst.msk [vmem:[#allocation2 + $0x40] sm:$0xff] %vm19, -1e+30
    %29 = vst.msk [vmem:[#allocation2 + $0x48] sm:$0xff] %vm19, -1e+30
    %30 = vst.msk [vmem:[#allocation2 + $0x50] sm:$0xff] %vm19, -1e+30
    %31 = vst.msk [vmem:[#allocation2 + $0x58] sm:$0xff] %vm19, -1e+30
    %32 = vst.msk [vmem:[#allocation2 + $0x60] sm:$0xff] %vm19, -1e+30
    %33 = vst.msk [vmem:[#allocation2 + $0x68] sm:$0xff] %vm19, -1e+30
    %34 = vst.msk [vmem:[#allocation2 + $0x70] sm:$0xff] %vm19, -1e+30
    %35 = vst.msk [vmem:[#allocation2 + $0x78] sm:$0xff] %vm19, -1e+30
    %36 = vst.msk [vmem:[#allocation3] sm:$0xff] %vm19, 0.0
    %37 = vst.msk [vmem:[#allocation3 + $0x8] sm:$0xff] %vm19, 0.0
    %38 = vst.msk [vmem:[#allocation3 + $0x10] sm:$0xff] %vm19, 0.0
    %39 = vst.msk [vmem:[#allocation3 + $0x18] sm:$0xff] %vm19, 0.0
    %40 = vst.msk [vmem:[#allocation3 + $0x20] sm:$0xff] %vm19, 0.0
    %41 = vst.msk [vmem:[#allocation3 + $0x28] sm:$0xff] %vm19, 0.0
    %42 = vst.msk [vmem:[#allocation3 + $0x30] sm:$0xff] %vm19, 0.0
    %43 = vst.msk [vmem:[#allocation3 + $0x38] sm:$0xff] %vm19, 0.0
    %44 = vst.msk [vmem:[#allocation3 + $0x40] sm:$0xff] %vm19, 0.0
    %45 = vst.msk [vmem:[#allocation3 + $0x48] sm:$0xff] %vm19, 0.0
    %46 = vst.msk [vmem:[#allocation3 + $0x50] sm:$0xff] %vm19, 0.0
    %47 = vst.msk [vmem:[#allocation3 + $0x58] sm:$0xff] %vm19, 0.0
    %48 = vst.msk [vmem:[#allocation3 + $0x60] sm:$0xff] %vm19, 0.0
    %49 = vst.msk [vmem:[#allocation3 + $0x68] sm:$0xff] %vm19, 0.0
    %50 = vst.msk [vmem:[#allocation3 + $0x70] sm:$0xff] %vm19, 0.0
    %51 = vst.msk [vmem:[#allocation3 + $0x78] sm:$0xff] %vm19, 0.0
    %52 = vst [vmem:[#allocation4] sm:$0xff] 0.0
    %53 = vst [vmem:[#allocation4 + $0x8] sm:$0xff] 0.0
    %54 = vst [vmem:[#allocation4 + $0x10] sm:$0xff] 0.0
    %55 = vst [vmem:[#allocation4 + $0x18] sm:$0xff] 0.0
    %56 = vst [vmem:[#allocation4 + $0x20] sm:$0xff] 0.0
    %57 = vst [vmem:[#allocation4 + $0x28] sm:$0xff] 0.0
    %58 = vst [vmem:[#allocation4 + $0x30] sm:$0xff] 0.0
    %59 = vst [vmem:[#allocation4 + $0x38] sm:$0xff] 0.0
    %60 = vst [vmem:[#allocation4 + $0x40] sm:$0xff] 0.0
    %61 = vst [vmem:[#allocation4 + $0x48] sm:$0xff] 0.0
    %62 = vst [vmem:[#allocation4 + $0x50] sm:$0xff] 0.0
    %63 = vst [vmem:[#allocation4 + $0x58] sm:$0xff] 0.0
    %64 = vst [vmem:[#allocation4 + $0x60] sm:$0xff] 0.0
    %65 = vst [vmem:[#allocation4 + $0x68] sm:$0xff] 0.0
    %66 = vst [vmem:[#allocation4 + $0x70] sm:$0xff] 0.0
    %67 = vst [vmem:[#allocation4 + $0x78] sm:$0xff] 0.0
  $region17: #{graph_attention_layer.3} parent=0 // pred_fallthru
    _
  %v68 = vld [vmem:[%s0] sm:$0xff]
  %v69 = vld [vmem:[%s0 + $0x8] sm:$0xff]
  %v70 = vld [vmem:[%s0 + $0x10] sm:$0xff]
  %v71 = vld [vmem:[%s0 + $0x18] sm:$0xff]
  %v72 = vld [vmem:[%s0 + $0x20] sm:$0xff]
  %v73 = vld [vmem:[%s0 + $0x28] sm:$0xff]
  %v74 = vld [vmem:[%s0 + $0x30] sm:$0xff]
  %v75 = vld [vmem:[%s0 + $0x38] sm:$0xff]
  %v76 = vld [vmem:[%s0 + $0x40] sm:$0xff]
  %v77 = vld [vmem:[%s0 + $0x48] sm:$0xff]
  %v78 = vld [vmem:[%s0 + $0x50] sm:$0xff]
  %v79 = vld [vmem:[%s0 + $0x58] sm:$0xff]
  %v80 = vld [vmem:[%s0 + $0x60] sm:$0xff]
  %v81 = vld [vmem:[%s0 + $0x68] sm:$0xff]
  %v82 = vld [vmem:[%s0 + $0x70] sm:$0xff]
  %v83 = vld [vmem:[%s0 + $0x78] sm:$0xff]
  %v84 = vld [vmem:[%s1] sm:$0x1]
  %86 = vset.pattern.permute.xlu0 0
  %87 = vperm.xlu0 %86, %v68
  %v88 = vpop.permute.xlu0 %87
  %91 = vset.pattern.permute.xlu0 0
  %92 = vperm.xlu0 %91, %v69
  %v93 = vpop.permute.xlu0 %92
  %96 = vset.pattern.permute.xlu0 0
  %97 = vperm.xlu0 %96, %v70
  %v98 = vpop.permute.xlu0 %97
  %101 = vset.pattern.permute.xlu0 0
  %102 = vperm.xlu0 %101, %v71
  %v103 = vpop.permute.xlu0 %102
  %106 = vset.pattern.permute.xlu0 0
  %107 = vperm.xlu0 %106, %v72
  %v108 = vpop.permute.xlu0 %107
  %111 = vset.pattern.permute.xlu0 0
  %112 = vperm.xlu0 %111, %v73
  %v113 = vpop.permute.xlu0 %112
  %116 = vset.pattern.permute.xlu0 0
  %117 = vperm.xlu0 %116, %v74
  %v118 = vpop.permute.xlu0 %117
  %121 = vset.pattern.permute.xlu0 0
  %122 = vperm.xlu0 %121, %v75
  %v123 = vpop.permute.xlu0 %122
  %126 = vset.pattern.permute.xlu0 0
  %127 = vperm.xlu0 %126, %v76
  %v128 = vpop.permute.xlu0 %127
  %131 = vset.pattern.permute.xlu0 0
  %132 = vperm.xlu0 %131, %v77
  %v133 = vpop.permute.xlu0 %132
  %136 = vset.pattern.permute.xlu0 0
  %137 = vperm.xlu0 %136, %v78
  %v138 = vpop.permute.xlu0 %137
  %141 = vset.pattern.permute.xlu0 0
  %142 = vperm.xlu0 %141, %v79
  %v143 = vpop.permute.xlu0 %142
  %146 = vset.pattern.permute.xlu0 0
  %147 = vperm.xlu0 %146, %v80
  %v148 = vpop.permute.xlu0 %147
  %151 = vset.pattern.permute.xlu0 0
  %152 = vperm.xlu0 %151, %v81
  %v153 = vpop.permute.xlu0 %152
  %156 = vset.pattern.permute.xlu0 0
  %157 = vperm.xlu0 %156, %v82
  %v158 = vpop.permute.xlu0 %157
  %161 = vset.pattern.permute.xlu0 0
  %162 = vperm.xlu0 %161, %v83
  %v163 = vpop.permute.xlu0 %162
  %v166 = vlaneseq
  %v167 = vshrl.u32 %v166, 7
  %v168 = vsub.s32 0, %v167
  %v169 = vrot.slane %v84, %v168
  %v171 = vadd.f32 %v88, %v169
  %v172 = vadd.f32 %v93, %v169
  %v173 = vadd.f32 %v98, %v169
  %v174 = vadd.f32 %v103, %v169
  %v175 = vadd.f32 %v108, %v169
  %v176 = vadd.f32 %v113, %v169
  %v177 = vadd.f32 %v118, %v169
  %v178 = vadd.f32 %v123, %v169
  %v179 = vadd.f32 %v128, %v169
  %v180 = vadd.f32 %v133, %v169
  %v181 = vadd.f32 %v138, %v169
  %v182 = vadd.f32 %v143, %v169
  %v183 = vadd.f32 %v148, %v169
  %v184 = vadd.f32 %v153, %v169
  %v185 = vadd.f32 %v158, %v169
  %v186 = vadd.f32 %v163, %v169
  %vm187 = vcmp.gt.f32.partialorder %v171, 0.0
  %vm188 = vcmp.gt.f32.partialorder %v172, 0.0
  %vm189 = vcmp.gt.f32.partialorder %v173, 0.0
  %vm190 = vcmp.gt.f32.partialorder %v174, 0.0
  %vm191 = vcmp.gt.f32.partialorder %v175, 0.0
  %vm192 = vcmp.gt.f32.partialorder %v176, 0.0
  %vm193 = vcmp.gt.f32.partialorder %v177, 0.0
  %vm194 = vcmp.gt.f32.partialorder %v178, 0.0
  %vm195 = vcmp.gt.f32.partialorder %v179, 0.0
  %vm196 = vcmp.gt.f32.partialorder %v180, 0.0
  %vm197 = vcmp.gt.f32.partialorder %v181, 0.0
  %vm198 = vcmp.gt.f32.partialorder %v182, 0.0
  %vm199 = vcmp.gt.f32.partialorder %v183, 0.0
  %vm200 = vcmp.gt.f32.partialorder %v184, 0.0
  %vm201 = vcmp.gt.f32.partialorder %v185, 0.0
  %vm202 = vcmp.gt.f32.partialorder %v186, 0.0
  %v203 = vmul.f32 %v171, 0.01
  %v204 = vmul.f32 %v172, 0.01
  %v205 = vmul.f32 %v173, 0.01
  %v206 = vmul.f32 %v174, 0.01
  %v207 = vmul.f32 %v175, 0.01
  %v208 = vmul.f32 %v176, 0.01
  %v209 = vmul.f32 %v177, 0.01
  %v210 = vmul.f32 %v178, 0.01
  %v211 = vmul.f32 %v179, 0.01
  %v212 = vmul.f32 %v180, 0.01
  %v213 = vmul.f32 %v181, 0.01
  %v214 = vmul.f32 %v182, 0.01
  %v215 = vmul.f32 %v183, 0.01
  %v216 = vmul.f32 %v184, 0.01
  %v217 = vmul.f32 %v185, 0.01
  %v218 = vmul.f32 %v186, 0.01
  %v219 = vsel %vm187, %v171, %v203
  %v220 = vsel %vm188, %v172, %v204
  %v221 = vsel %vm189, %v173, %v205
  %v222 = vsel %vm190, %v174, %v206
  %v223 = vsel %vm191, %v175, %v207
  %v224 = vsel %vm192, %v176, %v208
  %v225 = vsel %vm193, %v177, %v209
  %v226 = vsel %vm194, %v178, %v210
  %v227 = vsel %vm195, %v179, %v211
  %v228 = vsel %vm196, %v180, %v212
  %v229 = vsel %vm197, %v181, %v213
  %v230 = vsel %vm198, %v182, %v214
  %v231 = vsel %vm199, %v183, %v215
  %v232 = vsel %vm200, %v184, %v216
  %v233 = vsel %vm201, %v185, %v217
  %v234 = vsel %vm202, %v186, %v218
  %v235 = vld [vmem:[#allocation2] sm:$0xff]
  %v236 = vld [vmem:[#allocation2 + $0x8] sm:$0xff]
  %v237 = vld [vmem:[#allocation2 + $0x10] sm:$0xff]
  %v238 = vld [vmem:[#allocation2 + $0x18] sm:$0xff]
  %v239 = vld [vmem:[#allocation2 + $0x20] sm:$0xff]
  %v240 = vld [vmem:[#allocation2 + $0x28] sm:$0xff]
  %v241 = vld [vmem:[#allocation2 + $0x30] sm:$0xff]
  %v242 = vld [vmem:[#allocation2 + $0x38] sm:$0xff]
  %v243 = vld [vmem:[#allocation2 + $0x40] sm:$0xff]
  %v244 = vld [vmem:[#allocation2 + $0x48] sm:$0xff]
  %v245 = vld [vmem:[#allocation2 + $0x50] sm:$0xff]
  %v246 = vld [vmem:[#allocation2 + $0x58] sm:$0xff]
  %v247 = vld [vmem:[#allocation2 + $0x60] sm:$0xff]
  %v248 = vld [vmem:[#allocation2 + $0x68] sm:$0xff]
  %v249 = vld [vmem:[#allocation2 + $0x70] sm:$0xff]
  %v250 = vld [vmem:[#allocation2 + $0x78] sm:$0xff]
  %251 = vmax.xlane.f32.xlu0 %v219
  %v252 = vpop.xlane.xlu0 %251
  %253 = vmax.xlane.f32.xlu0 %v220
  %v254 = vpop.xlane.xlu0 %253
  %255 = vmax.xlane.f32.xlu0 %v221
  %v256 = vpop.xlane.xlu0 %255
  %257 = vmax.xlane.f32.xlu0 %v222
  %v258 = vpop.xlane.xlu0 %257
  %259 = vmax.xlane.f32.xlu0 %v223
  %v260 = vpop.xlane.xlu0 %259
  %261 = vmax.xlane.f32.xlu0 %v224
  %v262 = vpop.xlane.xlu0 %261
  %263 = vmax.xlane.f32.xlu0 %v225
  %v264 = vpop.xlane.xlu0 %263
  %265 = vmax.xlane.f32.xlu0 %v226
  %v266 = vpop.xlane.xlu0 %265
  %267 = vmax.xlane.f32.xlu0 %v227
  %v268 = vpop.xlane.xlu0 %267
  %269 = vmax.xlane.f32.xlu0 %v228
  %v270 = vpop.xlane.xlu0 %269
  %271 = vmax.xlane.f32.xlu0 %v229
  %v272 = vpop.xlane.xlu0 %271
  %273 = vmax.xlane.f32.xlu0 %v230
  %v274 = vpop.xlane.xlu0 %273
  %275 = vmax.xlane.f32.xlu0 %v231
  %v276 = vpop.xlane.xlu0 %275
  %277 = vmax.xlane.f32.xlu0 %v232
  %v278 = vpop.xlane.xlu0 %277
  %279 = vmax.xlane.f32.xlu0 %v233
  %v280 = vpop.xlane.xlu0 %279
  %281 = vmax.xlane.f32.xlu0 %v234
  %v282 = vpop.xlane.xlu0 %281
  %v283 = vmax.f32 %v235, %v252
  %v284 = vmax.f32 %v236, %v254
  %v285 = vmax.f32 %v237, %v256
  %v286 = vmax.f32 %v238, %v258
  %v287 = vmax.f32 %v239, %v260
  %v288 = vmax.f32 %v240, %v262
  %v289 = vmax.f32 %v241, %v264
  %v290 = vmax.f32 %v242, %v266
  %v291 = vmax.f32 %v243, %v268
  %v292 = vmax.f32 %v244, %v270
  %v293 = vmax.f32 %v245, %v272
  %v294 = vmax.f32 %v246, %v274
  %v295 = vmax.f32 %v247, %v276
  %v296 = vmax.f32 %v248, %v278
  %v297 = vmax.f32 %v249, %v280
  %v298 = vmax.f32 %v250, %v282
  %v299 = vsub.f32 %v235, %v283
  %v300 = vsub.f32 %v236, %v284
  %v301 = vsub.f32 %v237, %v285
  %v302 = vsub.f32 %v238, %v286
  %v303 = vsub.f32 %v239, %v287
  %v304 = vsub.f32 %v240, %v288
  %v305 = vsub.f32 %v241, %v289
  %v306 = vsub.f32 %v242, %v290
  %v307 = vsub.f32 %v243, %v291
  %v308 = vsub.f32 %v244, %v292
  %v309 = vsub.f32 %v245, %v293
  %v310 = vsub.f32 %v246, %v294
  %v311 = vsub.f32 %v247, %v295
  %v312 = vsub.f32 %v248, %v296
  %v313 = vsub.f32 %v249, %v297
  %v314 = vsub.f32 %v250, %v298
  %v315 = vmul.f32 %v299, 1.442695
  %v316 = vpow.pop %v315
  %v317 = vmul.f32 %v300, 1.442695
  %v318 = vpow.pop %v317
  %v319 = vmul.f32 %v301, 1.442695
  %v320 = vpow.pop %v319
  %v321 = vmul.f32 %v302, 1.442695
  %v322 = vpow.pop %v321
  %v323 = vmul.f32 %v303, 1.442695
  %v324 = vpow.pop %v323
  %v325 = vmul.f32 %v304, 1.442695
  %v326 = vpow.pop %v325
  %v327 = vmul.f32 %v305, 1.442695
  %v328 = vpow.pop %v327
  %v329 = vmul.f32 %v306, 1.442695
  %v330 = vpow.pop %v329
  %v331 = vmul.f32 %v307, 1.442695
  %v332 = vpow.pop %v331
  %v333 = vmul.f32 %v308, 1.442695
  %v334 = vpow.pop %v333
  %v335 = vmul.f32 %v309, 1.442695
  %v336 = vpow.pop %v335
  %v337 = vmul.f32 %v310, 1.442695
  %v338 = vpow.pop %v337
  %v339 = vmul.f32 %v311, 1.442695
  %v340 = vpow.pop %v339
  %v341 = vmul.f32 %v312, 1.442695
  %v342 = vpow.pop %v341
  %v343 = vmul.f32 %v313, 1.442695
  %v344 = vpow.pop %v343
  %v345 = vmul.f32 %v314, 1.442695
  %v346 = vpow.pop %v345
  %348 = vset.pattern.permute.xlu0 0
  %349 = vperm.xlu0 %348, %v283
  %v350 = vpop.permute.xlu0 %349
  %353 = vset.pattern.permute.xlu0 0
  %354 = vperm.xlu0 %353, %v284
  %v355 = vpop.permute.xlu0 %354
  %358 = vset.pattern.permute.xlu0 0
  %359 = vperm.xlu0 %358, %v285
  %v360 = vpop.permute.xlu0 %359
  %363 = vset.pattern.permute.xlu0 0
  %364 = vperm.xlu0 %363, %v286
  %v365 = vpop.permute.xlu0 %364
  %368 = vset.pattern.permute.xlu0 0
  %369 = vperm.xlu0 %368, %v287
  %v370 = vpop.permute.xlu0 %369
  %373 = vset.pattern.permute.xlu0 0
  %374 = vperm.xlu0 %373, %v288
  %v375 = vpop.permute.xlu0 %374
  %378 = vset.pattern.permute.xlu0 0
  %379 = vperm.xlu0 %378, %v289
  %v380 = vpop.permute.xlu0 %379
  %383 = vset.pattern.permute.xlu0 0
  %384 = vperm.xlu0 %383, %v290
  %v385 = vpop.permute.xlu0 %384
  %388 = vset.pattern.permute.xlu0 0
  %389 = vperm.xlu0 %388, %v291
  %v390 = vpop.permute.xlu0 %389
  %393 = vset.pattern.permute.xlu0 0
  %394 = vperm.xlu0 %393, %v292
  %v395 = vpop.permute.xlu0 %394
  %398 = vset.pattern.permute.xlu0 0
  %399 = vperm.xlu0 %398, %v293
  %v400 = vpop.permute.xlu0 %399
  %403 = vset.pattern.permute.xlu0 0
  %404 = vperm.xlu0 %403, %v294
  %v405 = vpop.permute.xlu0 %404
  %408 = vset.pattern.permute.xlu0 0
  %409 = vperm.xlu0 %408, %v295
  %v410 = vpop.permute.xlu0 %409
  %413 = vset.pattern.permute.xlu0 0
  %414 = vperm.xlu0 %413, %v296
  %v415 = vpop.permute.xlu0 %414
  %418 = vset.pattern.permute.xlu0 0
  %419 = vperm.xlu0 %418, %v297
  %v420 = vpop.permute.xlu0 %419
  %423 = vset.pattern.permute.xlu0 0
  %424 = vperm.xlu0 %423, %v298
  %v425 = vpop.permute.xlu0 %424
  %v427 = vsub.f32 %v219, %v350
  %v428 = vsub.f32 %v220, %v355
  %v429 = vsub.f32 %v221, %v360
  %v430 = vsub.f32 %v222, %v365
  %v431 = vsub.f32 %v223, %v370
  %v432 = vsub.f32 %v224, %v375
  %v433 = vsub.f32 %v225, %v380
  %v434 = vsub.f32 %v226, %v385
  %v435 = vsub.f32 %v227, %v390
  %v436 = vsub.f32 %v228, %v395
  %v437 = vsub.f32 %v229, %v400
  %v438 = vsub.f32 %v230, %v405
  %v439 = vsub.f32 %v231, %v410
  %v440 = vsub.f32 %v232, %v415
  %v441 = vsub.f32 %v233, %v420
  %v442 = vsub.f32 %v234, %v425
  %v443 = vmul.f32 %v427, 1.442695
  %v444 = vpow.pop %v443
  %v445 = vmul.f32 %v428, 1.442695
  %v446 = vpow.pop %v445
  %v447 = vmul.f32 %v429, 1.442695
  %v448 = vpow.pop %v447
  %v449 = vmul.f32 %v430, 1.442695
  %v450 = vpow.pop %v449
  %v451 = vmul.f32 %v431, 1.442695
  %v452 = vpow.pop %v451
  %v453 = vmul.f32 %v432, 1.442695
  %v454 = vpow.pop %v453
  %v455 = vmul.f32 %v433, 1.442695
  %v456 = vpow.pop %v455
  %v457 = vmul.f32 %v434, 1.442695
  %v458 = vpow.pop %v457
  %v459 = vmul.f32 %v435, 1.442695
  %v460 = vpow.pop %v459
  %v461 = vmul.f32 %v436, 1.442695
  %v462 = vpow.pop %v461
  %v463 = vmul.f32 %v437, 1.442695
  %v464 = vpow.pop %v463
  %v465 = vmul.f32 %v438, 1.442695
  %v466 = vpow.pop %v465
  %v467 = vmul.f32 %v439, 1.442695
  %v468 = vpow.pop %v467
  %v469 = vmul.f32 %v440, 1.442695
  %v470 = vpow.pop %v469
  %v471 = vmul.f32 %v441, 1.442695
  %v472 = vpow.pop %v471
  %v473 = vmul.f32 %v442, 1.442695
  %v474 = vpow.pop %v473
  %v475 = vld [vmem:[#allocation3] sm:$0xff]
  %v476 = vld [vmem:[#allocation3 + $0x8] sm:$0xff]
  %v477 = vld [vmem:[#allocation3 + $0x10] sm:$0xff]
  %v478 = vld [vmem:[#allocation3 + $0x18] sm:$0xff]
  %v479 = vld [vmem:[#allocation3 + $0x20] sm:$0xff]
  %v480 = vld [vmem:[#allocation3 + $0x28] sm:$0xff]
  %v481 = vld [vmem:[#allocation3 + $0x30] sm:$0xff]
  %v482 = vld [vmem:[#allocation3 + $0x38] sm:$0xff]
  %v483 = vld [vmem:[#allocation3 + $0x40] sm:$0xff]
  %v484 = vld [vmem:[#allocation3 + $0x48] sm:$0xff]
  %v485 = vld [vmem:[#allocation3 + $0x50] sm:$0xff]
  %v486 = vld [vmem:[#allocation3 + $0x58] sm:$0xff]
  %v487 = vld [vmem:[#allocation3 + $0x60] sm:$0xff]
  %v488 = vld [vmem:[#allocation3 + $0x68] sm:$0xff]
  %v489 = vld [vmem:[#allocation3 + $0x70] sm:$0xff]
  %v490 = vld [vmem:[#allocation3 + $0x78] sm:$0xff]
  %v491 = vmul.f32 %v316, %v475
  %v492 = vmul.f32 %v318, %v476
  %v493 = vmul.f32 %v320, %v477
  %v494 = vmul.f32 %v322, %v478
  %v495 = vmul.f32 %v324, %v479
  %v496 = vmul.f32 %v326, %v480
  %v497 = vmul.f32 %v328, %v481
  %v498 = vmul.f32 %v330, %v482
  %v499 = vmul.f32 %v332, %v483
  %v500 = vmul.f32 %v334, %v484
  %v501 = vmul.f32 %v336, %v485
  %v502 = vmul.f32 %v338, %v486
  %v503 = vmul.f32 %v340, %v487
  %v504 = vmul.f32 %v342, %v488
  %v505 = vmul.f32 %v344, %v489
  %v506 = vmul.f32 %v346, %v490
  %507 = vadd.xlane.f32.xlu0 %v444
  %v508 = vpop.xlane.xlu0 %507
  %509 = vadd.xlane.f32.xlu0 %v446
  %v510 = vpop.xlane.xlu0 %509
  %511 = vadd.xlane.f32.xlu0 %v448
  %v512 = vpop.xlane.xlu0 %511
  %513 = vadd.xlane.f32.xlu0 %v450
  %v514 = vpop.xlane.xlu0 %513
  %515 = vadd.xlane.f32.xlu0 %v452
  %v516 = vpop.xlane.xlu0 %515
  %517 = vadd.xlane.f32.xlu0 %v454
  %v518 = vpop.xlane.xlu0 %517
  %519 = vadd.xlane.f32.xlu0 %v456
  %v520 = vpop.xlane.xlu0 %519
  %521 = vadd.xlane.f32.xlu0 %v458
  %v522 = vpop.xlane.xlu0 %521
  %523 = vadd.xlane.f32.xlu0 %v460
  %v524 = vpop.xlane.xlu0 %523
  %525 = vadd.xlane.f32.xlu0 %v462
  %v526 = vpop.xlane.xlu0 %525
  %527 = vadd.xlane.f32.xlu0 %v464
  %v528 = vpop.xlane.xlu0 %527
  %529 = vadd.xlane.f32.xlu0 %v466
  %v530 = vpop.xlane.xlu0 %529
  %531 = vadd.xlane.f32.xlu0 %v468
  %v532 = vpop.xlane.xlu0 %531
  %533 = vadd.xlane.f32.xlu0 %v470
  %v534 = vpop.xlane.xlu0 %533
  %535 = vadd.xlane.f32.xlu0 %v472
  %v536 = vpop.xlane.xlu0 %535
  %537 = vadd.xlane.f32.xlu0 %v474
  %v538 = vpop.xlane.xlu0 %537
  %v539 = vadd.f32 %v491, %v508
  %v540 = vadd.f32 %v492, %v510
  %v541 = vadd.f32 %v493, %v512
  %v542 = vadd.f32 %v494, %v514
  %v543 = vadd.f32 %v495, %v516
  %v544 = vadd.f32 %v496, %v518
  %v545 = vadd.f32 %v497, %v520
  %v546 = vadd.f32 %v498, %v522
  %v547 = vadd.f32 %v499, %v524
  %v548 = vadd.f32 %v500, %v526
  %v549 = vadd.f32 %v501, %v528
  %v550 = vadd.f32 %v502, %v530
  %v551 = vadd.f32 %v503, %v532
  %v552 = vadd.f32 %v504, %v534
  %v553 = vadd.f32 %v505, %v536
  %v554 = vadd.f32 %v506, %v538
  %vm555 = vcmask 7168
  %556 = vst.msk [vmem:[#allocation3] sm:$0xff] %vm555, %v539
  %557 = vst.msk [vmem:[#allocation3 + $0x8] sm:$0xff] %vm555, %v540
  %558 = vst.msk [vmem:[#allocation3 + $0x10] sm:$0xff] %vm555, %v541
  %559 = vst.msk [vmem:[#allocation3 + $0x18] sm:$0xff] %vm555, %v542
  %560 = vst.msk [vmem:[#allocation3 + $0x20] sm:$0xff] %vm555, %v543
  %561 = vst.msk [vmem:[#allocation3 + $0x28] sm:$0xff] %vm555, %v544
  %562 = vst.msk [vmem:[#allocation3 + $0x30] sm:$0xff] %vm555, %v545
  %563 = vst.msk [vmem:[#allocation3 + $0x38] sm:$0xff] %vm555, %v546
  %564 = vst.msk [vmem:[#allocation3 + $0x40] sm:$0xff] %vm555, %v547
  %565 = vst.msk [vmem:[#allocation3 + $0x48] sm:$0xff] %vm555, %v548
  %566 = vst.msk [vmem:[#allocation3 + $0x50] sm:$0xff] %vm555, %v549
  %567 = vst.msk [vmem:[#allocation3 + $0x58] sm:$0xff] %vm555, %v550
  %568 = vst.msk [vmem:[#allocation3 + $0x60] sm:$0xff] %vm555, %v551
  %569 = vst.msk [vmem:[#allocation3 + $0x68] sm:$0xff] %vm555, %v552
  %570 = vst.msk [vmem:[#allocation3 + $0x70] sm:$0xff] %vm555, %v553
  %571 = vst.msk [vmem:[#allocation3 + $0x78] sm:$0xff] %vm555, %v554
  %v572 = vld [vmem:[#allocation4] sm:$0xff]
  %v573 = vld [vmem:[#allocation4 + $0x8] sm:$0xff]
  %v574 = vld [vmem:[#allocation4 + $0x10] sm:$0xff]
  %v575 = vld [vmem:[#allocation4 + $0x18] sm:$0xff]
  %v576 = vld [vmem:[#allocation4 + $0x20] sm:$0xff]
  %v577 = vld [vmem:[#allocation4 + $0x28] sm:$0xff]
  %v578 = vld [vmem:[#allocation4 + $0x30] sm:$0xff]
  %v579 = vld [vmem:[#allocation4 + $0x38] sm:$0xff]
  %v580 = vld [vmem:[#allocation4 + $0x40] sm:$0xff]
  %v581 = vld [vmem:[#allocation4 + $0x48] sm:$0xff]
  %v582 = vld [vmem:[#allocation4 + $0x50] sm:$0xff]
  %v583 = vld [vmem:[#allocation4 + $0x58] sm:$0xff]
  %v584 = vld [vmem:[#allocation4 + $0x60] sm:$0xff]
  %v585 = vld [vmem:[#allocation4 + $0x68] sm:$0xff]
  %v586 = vld [vmem:[#allocation4 + $0x70] sm:$0xff]
  %v587 = vld [vmem:[#allocation4 + $0x78] sm:$0xff]
  %589 = vset.pattern.permute.xlu0 0
  %590 = vperm.xlu0 %589, %v316
  %v591 = vpop.permute.xlu0 %590
  %594 = vset.pattern.permute.xlu0 0
  %595 = vperm.xlu0 %594, %v318
  %v596 = vpop.permute.xlu0 %595
  %599 = vset.pattern.permute.xlu0 0
  %600 = vperm.xlu0 %599, %v320
  %v601 = vpop.permute.xlu0 %600
  %604 = vset.pattern.permute.xlu0 0
  %605 = vperm.xlu0 %604, %v322
  %v606 = vpop.permute.xlu0 %605
  %609 = vset.pattern.permute.xlu0 0
  %610 = vperm.xlu0 %609, %v324
  %v611 = vpop.permute.xlu0 %610
  %614 = vset.pattern.permute.xlu0 0
  %615 = vperm.xlu0 %614, %v326
  %v616 = vpop.permute.xlu0 %615
  %619 = vset.pattern.permute.xlu0 0
  %620 = vperm.xlu0 %619, %v328
  %v621 = vpop.permute.xlu0 %620
  %624 = vset.pattern.permute.xlu0 0
  %625 = vperm.xlu0 %624, %v330
  %v626 = vpop.permute.xlu0 %625
  %629 = vset.pattern.permute.xlu0 0
  %630 = vperm.xlu0 %629, %v332
  %v631 = vpop.permute.xlu0 %630
  %634 = vset.pattern.permute.xlu0 0
  %635 = vperm.xlu0 %634, %v334
  %v636 = vpop.permute.xlu0 %635
  %639 = vset.pattern.permute.xlu0 0
  %640 = vperm.xlu0 %639, %v336
  %v641 = vpop.permute.xlu0 %640
  %644 = vset.pattern.permute.xlu0 0
  %645 = vperm.xlu0 %644, %v338
  %v646 = vpop.permute.xlu0 %645
  %649 = vset.pattern.permute.xlu0 0
  %650 = vperm.xlu0 %649, %v340
  %v651 = vpop.permute.xlu0 %650
  %654 = vset.pattern.permute.xlu0 0
  %655 = vperm.xlu0 %654, %v342
  %v656 = vpop.permute.xlu0 %655
  %659 = vset.pattern.permute.xlu0 0
  %660 = vperm.xlu0 %659, %v344
  %v661 = vpop.permute.xlu0 %660
  %664 = vset.pattern.permute.xlu0 0
  %665 = vperm.xlu0 %664, %v346
  %v666 = vpop.permute.xlu0 %665
  %v668 = vmul.f32 %v591, %v572
  %v669 = vmul.f32 %v596, %v573
  %v670 = vmul.f32 %v601, %v574
  %v671 = vmul.f32 %v606, %v575
  %v672 = vmul.f32 %v611, %v576
  %v673 = vmul.f32 %v616, %v577
  %v674 = vmul.f32 %v621, %v578
  %v675 = vmul.f32 %v626, %v579
  %v676 = vmul.f32 %v631, %v580
  %v677 = vmul.f32 %v636, %v581
  %v678 = vmul.f32 %v641, %v582
  %v679 = vmul.f32 %v646, %v583
  %v680 = vmul.f32 %v651, %v584
  %v681 = vmul.f32 %v656, %v585
  %v682 = vmul.f32 %v661, %v586
  %v683 = vmul.f32 %v666, %v587
  %v684 = vpack.c.bf16 %v446, %v444
  %v685 = vpack.c.bf16 %v450, %v448
  %v686 = vpack.c.bf16 %v454, %v452
  %v687 = vpack.c.bf16 %v458, %v456
  %v688 = vpack.c.bf16 %v462, %v460
  %v689 = vpack.c.bf16 %v466, %v464
  %v690 = vpack.c.bf16 %v470, %v468
  %v691 = vpack.c.bf16 %v474, %v472
  %v692 = vld [vmem:[%s2] sm:$0xf]
  %v693 = vld [vmem:[%s2 + $0x4] sm:$0xf]
  %v694 = vld [vmem:[%s2 + $0x8] sm:$0xf]
  %v695 = vld [vmem:[%s2 + $0xc] sm:$0xf]
  %v696 = vld [vmem:[%s2 + $0x10] sm:$0xf]
  %v697 = vld [vmem:[%s2 + $0x14] sm:$0xf]
  %v698 = vld [vmem:[%s2 + $0x18] sm:$0xf]
  %v699 = vld [vmem:[%s2 + $0x1c] sm:$0xf]
  %v700 = vld [vmem:[%s2 + $0x20] sm:$0xf]
  %v701 = vld [vmem:[%s2 + $0x24] sm:$0xf]
  %v702 = vld [vmem:[%s2 + $0x28] sm:$0xf]
  %v703 = vld [vmem:[%s2 + $0x2c] sm:$0xf]
  %v704 = vld [vmem:[%s2 + $0x30] sm:$0xf]
  %v705 = vld [vmem:[%s2 + $0x34] sm:$0xf]
  %v706 = vld [vmem:[%s2 + $0x38] sm:$0xf]
  %v707 = vld [vmem:[%s2 + $0x3c] sm:$0xf]
  %v724 = vunpack.c.l.b16 %v692
  %v725 = vunpack.c.l.b16 %v693
  %v726 = vunpack.c.l.b16 %v694
  %v727 = vunpack.c.l.b16 %v695
  %v728 = vunpack.c.l.b16 %v696
  %v729 = vunpack.c.l.b16 %v697
  %v730 = vunpack.c.l.b16 %v698
  %v731 = vunpack.c.l.b16 %v699
  %v732 = vunpack.c.l.b16 %v700
  %v733 = vunpack.c.l.b16 %v701
  %v734 = vunpack.c.l.b16 %v702
  %v735 = vunpack.c.l.b16 %v703
  %v736 = vunpack.c.l.b16 %v704
  %v737 = vunpack.c.l.b16 %v705
  %v738 = vunpack.c.l.b16 %v706
  %v739 = vunpack.c.l.b16 %v707
  %v740 = vpack.c.b16 %v725, %v724
  %v741 = vpack.c.b16 %v727, %v726
  %v742 = vpack.c.b16 %v729, %v728
  %v743 = vpack.c.b16 %v731, %v730
  %v744 = vpack.c.b16 %v733, %v732
  %v745 = vpack.c.b16 %v735, %v734
  %v746 = vpack.c.b16 %v737, %v736
  %v747 = vpack.c.b16 %v739, %v738
  %756 = vmatprep.subr.bf16.mxu0 0
  %757 = vmatpush1.bf16.msra.mxu0 %v740
  %758 = vmatprep.subr.bf16.mxu0 0
  %759 = vmatpush1.bf16.msra.mxu0 %v741
  %760 = vmatprep.subr.bf16.mxu0 0
  %761 = vmatpush1.bf16.msra.mxu0 %v742
  %762 = vmatprep.subr.bf16.mxu0 0
  %763 = vmatpush1.bf16.msra.mxu0 %v743
  %764 = vmatprep.subr.bf16.mxu0 0
  %765 = vmatpush1.bf16.msra.mxu0 %v744
  %766 = vmatprep.subr.bf16.mxu0 0
  %767 = vmatpush1.bf16.msra.mxu0 %v745
  %768 = vmatprep.subr.bf16.mxu0 0
  %769 = vmatpush1.bf16.msra.mxu0 %v746
  %770 = vmatprep.subr.bf16.mxu0 0
  %771 = vmatpush1.bf16.msra.mxu0 %v747
  %772 = vmatprep.subr.bf16.mxu0 0
  %773 = vmatpush1.bf16.msra.mxu0 0
  %774 = vmatprep.subr.bf16.mxu0 0
  %775 = vmatpush1.bf16.msra.mxu0 0
  %776 = vmatprep.subr.bf16.mxu0 0
  %777 = vmatpush1.bf16.msra.mxu0 0
  %778 = vmatprep.subr.bf16.mxu0 0
  %779 = vmatpush1.bf16.msra.mxu0 0
  %780 = vmatprep.subr.bf16.mxu0 0
  %781 = vmatpush1.bf16.msra.mxu0 0
  %782 = vmatprep.subr.bf16.mxu0 0
  %783 = vmatpush1.bf16.msra.mxu0 0
  %784 = vmatprep.subr.bf16.mxu0 0
  %785 = vmatpush1.bf16.msra.mxu0 0
  %786 = vmatprep.subr.bf16.mxu0 0
  %787 = vmatpush1.bf16.msra.mxu0 0
  %788 = vmatprep.mubr.bf16.mxu0 0
  %789 = vmatmul.mubr.bf16.gmra.mrb[0].mxu0 %v684
  %v790 = vpop.f32.mrb[0].mxu0
  %v791 = vadd.f32 0.0, %v790
  %v792 = vpop.f32.mrb[0].mxu0
  %v793 = vpop.f32.mrb[0].mxu0
  %v794 = vadd.f32 0.0, %v793
  %v795 = vpop.f32.mrb[0].mxu0
  %796 = vmatprep.mubr.bf16.mxu0 0
  %797 = vmatmul.mubr.bf16.gmra.mrb[0].mxu0 %v685
  %v798 = vpop.f32.mrb[0].mxu0
  %v799 = vadd.f32 0.0, %v798
  %v800 = vpop.f32.mrb[0].mxu0
  %v801 = vpop.f32.mrb[0].mxu0
  %v802 = vadd.f32 0.0, %v801
  %v803 = vpop.f32.mrb[0].mxu0
  %804 = vmatprep.mubr.bf16.mxu0 0
  %805 = vmatmul.mubr.bf16.gmra.mrb[0].mxu0 %v686
  %v806 = vpop.f32.mrb[0].mxu0
  %v807 = vadd.f32 0.0, %v806
  %v808 = vpop.f32.mrb[0].mxu0
  %v809 = vpop.f32.mrb[0].mxu0
  %v810 = vadd.f32 0.0, %v809
  %v811 = vpop.f32.mrb[0].mxu0
  %812 = vmatprep.mubr.bf16.mxu0 0
  %813 = vmatmul.mubr.bf16.gmra.mrb[0].mxu0 %v687
  %v814 = vpop.f32.mrb[0].mxu0
  %v815 = vadd.f32 0.0, %v814
  %v816 = vpop.f32.mrb[0].mxu0
  %v817 = vpop.f32.mrb[0].mxu0
  %v818 = vadd.f32 0.0, %v817
  %v819 = vpop.f32.mrb[0].mxu0
  %820 = vmatprep.mubr.bf16.mxu0 0
  %821 = vmatmul.mubr.bf16.gmra.mrb[0].mxu0 %v688
  %v822 = vpop.f32.mrb[0].mxu0
  %v823 = vadd.f32 0.0, %v822
  %v824 = vpop.f32.mrb[0].mxu0
  %v825 = vpop.f32.mrb[0].mxu0
  %v826 = vadd.f32 0.0, %v825
  %v827 = vpop.f32.mrb[0].mxu0
  %828 = vmatprep.mubr.bf16.mxu0 0
  %829 = vmatmul.mubr.bf16.gmra.mrb[0].mxu0 %v689
  %v830 = vpop.f32.mrb[0].mxu0
  %v831 = vadd.f32 0.0, %v830
  %v832 = vpop.f32.mrb[0].mxu0
  %v833 = vpop.f32.mrb[0].mxu0
  %v834 = vadd.f32 0.0, %v833
  %v835 = vpop.f32.mrb[0].mxu0
  %836 = vmatprep.mubr.bf16.mxu0 0
  %837 = vmatmul.mubr.bf16.gmra.mrb[0].mxu0 %v690
  %v838 = vpop.f32.mrb[0].mxu0
  %v839 = vadd.f32 0.0, %v838
  %v840 = vpop.f32.mrb[0].mxu0
  %v841 = vpop.f32.mrb[0].mxu0
  %v842 = vadd.f32 0.0, %v841
  %v843 = vpop.f32.mrb[0].mxu0
  %844 = vmatprep.mubr.bf16.mxu0 0
  %845 = vmatmul.mubr.bf16.gmra.mrb[0].mxu0 %v691
  %v846 = vpop.f32.mrb[0].mxu0
  %v847 = vadd.f32 0.0, %v846
  %v848 = vpop.f32.mrb[0].mxu0
  %v849 = vpop.f32.mrb[0].mxu0
  %v850 = vadd.f32 0.0, %v849
  %v851 = vpop.f32.mrb[0].mxu0
  %852 = vdwg.mxu0
  %v853 = vadd.f32 %v668, %v791
  %v854 = vadd.f32 %v669, %v794
  %v855 = vadd.f32 %v670, %v799
  %v856 = vadd.f32 %v671, %v802
  %v857 = vadd.f32 %v672, %v807
  %v858 = vadd.f32 %v673, %v810
  %v859 = vadd.f32 %v674, %v815
  %v860 = vadd.f32 %v675, %v818
  %v861 = vadd.f32 %v676, %v823
  %v862 = vadd.f32 %v677, %v826
  %v863 = vadd.f32 %v678, %v831
  %v864 = vadd.f32 %v679, %v834
  %v865 = vadd.f32 %v680, %v839
  %v866 = vadd.f32 %v681, %v842
  %v867 = vadd.f32 %v682, %v847
  %v868 = vadd.f32 %v683, %v850
  %869 = vst [vmem:[#allocation4] sm:$0xff] %v853
  %870 = vst [vmem:[#allocation4 + $0x8] sm:$0xff] %v854
  %871 = vst [vmem:[#allocation4 + $0x10] sm:$0xff] %v855
  %872 = vst [vmem:[#allocation4 + $0x18] sm:$0xff] %v856
  %873 = vst [vmem:[#allocation4 + $0x20] sm:$0xff] %v857
  %874 = vst [vmem:[#allocation4 + $0x28] sm:$0xff] %v858
  %875 = vst [vmem:[#allocation4 + $0x30] sm:$0xff] %v859
  %876 = vst [vmem:[#allocation4 + $0x38] sm:$0xff] %v860
  %877 = vst [vmem:[#allocation4 + $0x40] sm:$0xff] %v861
  %878 = vst [vmem:[#allocation4 + $0x48] sm:$0xff] %v862
  %879 = vst [vmem:[#allocation4 + $0x50] sm:$0xff] %v863
  %880 = vst [vmem:[#allocation4 + $0x58] sm:$0xff] %v864
  %881 = vst [vmem:[#allocation4 + $0x60] sm:$0xff] %v865
  %882 = vst [vmem:[#allocation4 + $0x68] sm:$0xff] %v866
  %883 = vst [vmem:[#allocation4 + $0x70] sm:$0xff] %v867
  %884 = vst [vmem:[#allocation4 + $0x78] sm:$0xff] %v868
  %885 = vst.msk [vmem:[#allocation2] sm:$0xff] %vm555, %v283
  %886 = vst.msk [vmem:[#allocation2 + $0x8] sm:$0xff] %vm555, %v284
  %887 = vst.msk [vmem:[#allocation2 + $0x10] sm:$0xff] %vm555, %v285
  %888 = vst.msk [vmem:[#allocation2 + $0x18] sm:$0xff] %vm555, %v286
  %889 = vst.msk [vmem:[#allocation2 + $0x20] sm:$0xff] %vm555, %v287
  %890 = vst.msk [vmem:[#allocation2 + $0x28] sm:$0xff] %vm555, %v288
  %891 = vst.msk [vmem:[#allocation2 + $0x30] sm:$0xff] %vm555, %v289
  %892 = vst.msk [vmem:[#allocation2 + $0x38] sm:$0xff] %vm555, %v290
  %893 = vst.msk [vmem:[#allocation2 + $0x40] sm:$0xff] %vm555, %v291
  %894 = vst.msk [vmem:[#allocation2 + $0x48] sm:$0xff] %vm555, %v292
  %895 = vst.msk [vmem:[#allocation2 + $0x50] sm:$0xff] %vm555, %v293
  %896 = vst.msk [vmem:[#allocation2 + $0x58] sm:$0xff] %vm555, %v294
  %897 = vst.msk [vmem:[#allocation2 + $0x60] sm:$0xff] %vm555, %v295
  %898 = vst.msk [vmem:[#allocation2 + $0x68] sm:$0xff] %vm555, %v296
  %899 = vst.msk [vmem:[#allocation2 + $0x70] sm:$0xff] %vm555, %v297
  %900 = vst.msk [vmem:[#allocation2 + $0x78] sm:$0xff] %vm555, %v298
  // Predicated region
  $region18: #{graph_attention_layer.3} parent=0 // pred_check
    %p901 = pneg %p15
  $region19: #{graph_attention_layer.3} parent=0 // pred_check_branch
    %903 = sbr.rel (%p901) target = $region21
  $region20: #{graph_attention_layer.3} parent=0 // pred_region
    %v904 = vld [vmem:[#allocation4] sm:$0xff]
    %v905 = vld [vmem:[#allocation4 + $0x8] sm:$0xff]
    %v906 = vld [vmem:[#allocation4 + $0x10] sm:$0xff]
    %v907 = vld [vmem:[#allocation4 + $0x18] sm:$0xff]
    %v908 = vld [vmem:[#allocation4 + $0x20] sm:$0xff]
    %v909 = vld [vmem:[#allocation4 + $0x28] sm:$0xff]
    %v910 = vld [vmem:[#allocation4 + $0x30] sm:$0xff]
    %v911 = vld [vmem:[#allocation4 + $0x38] sm:$0xff]
    %v912 = vld [vmem:[#allocation4 + $0x40] sm:$0xff]
    %v913 = vld [vmem:[#allocation4 + $0x48] sm:$0xff]
    %v914 = vld [vmem:[#allocation4 + $0x50] sm:$0xff]
    %v915 = vld [vmem:[#allocation4 + $0x58] sm:$0xff]
    %v916 = vld [vmem:[#allocation4 + $0x60] sm:$0xff]
    %v917 = vld [vmem:[#allocation4 + $0x68] sm:$0xff]
    %v918 = vld [vmem:[#allocation4 + $0x70] sm:$0xff]
    %v919 = vld [vmem:[#allocation4 + $0x78] sm:$0xff]
    %v920 = vld [vmem:[#allocation3] sm:$0xff]
    %v921 = vld [vmem:[#allocation3 + $0x8] sm:$0xff]
    %v922 = vld [vmem:[#allocation3 + $0x10] sm:$0xff]
    %v923 = vld [vmem:[#allocation3 + $0x18] sm:$0xff]
    %v924 = vld [vmem:[#allocation3 + $0x20] sm:$0xff]
    %v925 = vld [vmem:[#allocation3 + $0x28] sm:$0xff]
    %v926 = vld [vmem:[#allocation3 + $0x30] sm:$0xff]
    %v927 = vld [vmem:[#allocation3 + $0x38] sm:$0xff]
    %v928 = vld [vmem:[#allocation3 + $0x40] sm:$0xff]
    %v929 = vld [vmem:[#allocation3 + $0x48] sm:$0xff]
    %v930 = vld [vmem:[#allocation3 + $0x50] sm:$0xff]
    %v931 = vld [vmem:[#allocation3 + $0x58] sm:$0xff]
    %v932 = vld [vmem:[#allocation3 + $0x60] sm:$0xff]
    %v933 = vld [vmem:[#allocation3 + $0x68] sm:$0xff]
    %v934 = vld [vmem:[#allocation3 + $0x70] sm:$0xff]
    %v935 = vld [vmem:[#allocation3 + $0x78] sm:$0xff]
    %v936 = vrcp.pop %v920
    %v937 = vrcp.pop %v921
    %v938 = vrcp.pop %v922
    %v939 = vrcp.pop %v923
    %v940 = vrcp.pop %v924
    %v941 = vrcp.pop %v925
    %v942 = vrcp.pop %v926
    %v943 = vrcp.pop %v927
    %v944 = vrcp.pop %v928
    %v945 = vrcp.pop %v929
    %v946 = vrcp.pop %v930
    %v947 = vrcp.pop %v931
    %v948 = vrcp.pop %v932
    %v949 = vrcp.pop %v933
    %v950 = vrcp.pop %v934
    %v951 = vrcp.pop %v935
    %953 = vset.pattern.permute.xlu0 0
    %954 = vperm.xlu0 %953, %v936
    %v955 = vpop.permute.xlu0 %954
    %958 = vset.pattern.permute.xlu0 0
    %959 = vperm.xlu0 %958, %v937
    %v960 = vpop.permute.xlu0 %959
    %963 = vset.pattern.permute.xlu0 0
    %964 = vperm.xlu0 %963, %v938
    %v965 = vpop.permute.xlu0 %964
    %968 = vset.pattern.permute.xlu0 0
    %969 = vperm.xlu0 %968, %v939
    %v970 = vpop.permute.xlu0 %969
    %973 = vset.pattern.permute.xlu0 0
    %974 = vperm.xlu0 %973, %v940
    %v975 = vpop.permute.xlu0 %974
    %978 = vset.pattern.permute.xlu0 0
    %979 = vperm.xlu0 %978, %v941
    %v980 = vpop.permute.xlu0 %979
    %983 = vset.pattern.permute.xlu0 0
    %984 = vperm.xlu0 %983, %v942
    %v985 = vpop.permute.xlu0 %984
    %988 = vset.pattern.permute.xlu0 0
    %989 = vperm.xlu0 %988, %v943
    %v990 = vpop.permute.xlu0 %989
    %993 = vset.pattern.permute.xlu0 0
    %994 = vperm.xlu0 %993, %v944
    %v995 = vpop.permute.xlu0 %994
    %998 = vset.pattern.permute.xlu0 0
    %999 = vperm.xlu0 %998, %v945
    %v1000 = vpop.permute.xlu0 %999
    %1003 = vset.pattern.permute.xlu0 0
    %1004 = vperm.xlu0 %1003, %v946
    %v1005 = vpop.permute.xlu0 %1004
    %1008 = vset.pattern.permute.xlu0 0
    %1009 = vperm.xlu0 %1008, %v947
    %v1010 = vpop.permute.xlu0 %1009
    %1013 = vset.pattern.permute.xlu0 0
    %1014 = vperm.xlu0 %1013, %v948
    %v1015 = vpop.permute.xlu0 %1014
    %1018 = vset.pattern.permute.xlu0 0
    %1019 = vperm.xlu0 %1018, %v949
    %v1020 = vpop.permute.xlu0 %1019
    %1023 = vset.pattern.permute.xlu0 0
    %1024 = vperm.xlu0 %1023, %v950
    %v1025 = vpop.permute.xlu0 %1024
    %1028 = vset.pattern.permute.xlu0 0
    %1029 = vperm.xlu0 %1028, %v951
    %v1030 = vpop.permute.xlu0 %1029
    %v1032 = vmul.f32 %v904, %v955
    %v1033 = vmul.f32 %v905, %v960
    %v1034 = vmul.f32 %v906, %v965
    %v1035 = vmul.f32 %v907, %v970
    %v1036 = vmul.f32 %v908, %v975
    %v1037 = vmul.f32 %v909, %v980
    %v1038 = vmul.f32 %v910, %v985
    %v1039 = vmul.f32 %v911, %v990
    %v1040 = vmul.f32 %v912, %v995
    %v1041 = vmul.f32 %v913, %v1000
    %v1042 = vmul.f32 %v914, %v1005
    %v1043 = vmul.f32 %v915, %v1010
    %v1044 = vmul.f32 %v916, %v1015
    %v1045 = vmul.f32 %v917, %v1020
    %v1046 = vmul.f32 %v918, %v1025
    %v1047 = vmul.f32 %v919, %v1030
    %vm1048 = vcmp.gt.f32.partialorder %v1032, 0.0
    %vm1049 = vcmp.gt.f32.partialorder %v1033, 0.0
    %vm1050 = vcmp.gt.f32.partialorder %v1034, 0.0
    %vm1051 = vcmp.gt.f32.partialorder %v1035, 0.0
    %vm1052 = vcmp.gt.f32.partialorder %v1036, 0.0
    %vm1053 = vcmp.gt.f32.partialorder %v1037, 0.0
    %vm1054 = vcmp.gt.f32.partialorder %v1038, 0.0
    %vm1055 = vcmp.gt.f32.partialorder %v1039, 0.0
    %vm1056 = vcmp.gt.f32.partialorder %v1040, 0.0
    %vm1057 = vcmp.gt.f32.partialorder %v1041, 0.0
    %vm1058 = vcmp.gt.f32.partialorder %v1042, 0.0
    %vm1059 = vcmp.gt.f32.partialorder %v1043, 0.0
    %vm1060 = vcmp.gt.f32.partialorder %v1044, 0.0
    %vm1061 = vcmp.gt.f32.partialorder %v1045, 0.0
    %vm1062 = vcmp.gt.f32.partialorder %v1046, 0.0
    %vm1063 = vcmp.gt.f32.partialorder %v1047, 0.0
    %v1064 = vmin.f32 %v1032, 0.0
    %v1065 = vmin.f32 %v1033, 0.0
    %v1066 = vmin.f32 %v1034, 0.0
    %v1067 = vmin.f32 %v1035, 0.0
    %v1068 = vmin.f32 %v1036, 0.0
    %v1069 = vmin.f32 %v1037, 0.0
    %v1070 = vmin.f32 %v1038, 0.0
    %v1071 = vmin.f32 %v1039, 0.0
    %v1072 = vmin.f32 %v1040, 0.0
    %v1073 = vmin.f32 %v1041, 0.0
    %v1074 = vmin.f32 %v1042, 0.0
    %v1075 = vmin.f32 %v1043, 0.0
    %v1076 = vmin.f32 %v1044, 0.0
    %v1077 = vmin.f32 %v1045, 0.0
    %v1078 = vmin.f32 %v1046, 0.0
    %v1079 = vmin.f32 %v1047, 0.0
    %v1080 = vmul.f32 %v1064, 1.442695
    %v1081 = vpow.pop %v1080
    %v1082 = vmul.f32 %v1065, 1.442695
    %v1083 = vpow.pop %v1082
    %v1084 = vmul.f32 %v1066, 1.442695
    %v1085 = vpow.pop %v1084
    %v1086 = vmul.f32 %v1067, 1.442695
    %v1087 = vpow.pop %v1086
    %v1088 = vmul.f32 %v1068, 1.442695
    %v1089 = vpow.pop %v1088
    %v1090 = vmul.f32 %v1069, 1.442695
    %v1091 = vpow.pop %v1090
    %v1092 = vmul.f32 %v1070, 1.442695
    %v1093 = vpow.pop %v1092
    %v1094 = vmul.f32 %v1071, 1.442695
    %v1095 = vpow.pop %v1094
    %v1096 = vmul.f32 %v1072, 1.442695
    %v1097 = vpow.pop %v1096
    %v1098 = vmul.f32 %v1073, 1.442695
    %v1099 = vpow.pop %v1098
    %v1100 = vmul.f32 %v1074, 1.442695
    %v1101 = vpow.pop %v1100
    %v1102 = vmul.f32 %v1075, 1.442695
    %v1103 = vpow.pop %v1102
    %v1104 = vmul.f32 %v1076, 1.442695
    %v1105 = vpow.pop %v1104
    %v1106 = vmul.f32 %v1077, 1.442695
    %v1107 = vpow.pop %v1106
    %v1108 = vmul.f32 %v1078, 1.442695
    %v1109 = vpow.pop %v1108
    %v1110 = vmul.f32 %v1079, 1.442695
    %v1111 = vpow.pop %v1110
    %v1112 = vsub.f32 %v1081, 1.0
    %v1113 = vsub.f32 %v1083, 1.0
    %v1114 = vsub.f32 %v1085, 1.0
    %v1115 = vsub.f32 %v1087, 1.0
    %v1116 = vsub.f32 %v1089, 1.0
    %v1117 = vsub.f32 %v1091, 1.0
    %v1118 = vsub.f32 %v1093, 1.0
    %v1119 = vsub.f32 %v1095, 1.0
    %v1120 = vsub.f32 %v1097, 1.0
    %v1121 = vsub.f32 %v1099, 1.0
    %v1122 = vsub.f32 %v1101, 1.0
    %v1123 = vsub.f32 %v1103, 1.0
    %v1124 = vsub.f32 %v1105, 1.0
    %v1125 = vsub.f32 %v1107, 1.0
    %v1126 = vsub.f32 %v1109, 1.0
    %v1127 = vsub.f32 %v1111, 1.0
    %v1128 = vsel %vm1048, %v1032, %v1112
    %v1129 = vsel %vm1049, %v1033, %v1113
    %v1130 = vsel %vm1050, %v1034, %v1114
    %v1131 = vsel %vm1051, %v1035, %v1115
    %v1132 = vsel %vm1052, %v1036, %v1116
    %v1133 = vsel %vm1053, %v1037, %v1117
    %v1134 = vsel %vm1054, %v1038, %v1118
    %v1135 = vsel %vm1055, %v1039, %v1119
    %v1136 = vsel %vm1056, %v1040, %v1120
    %v1137 = vsel %vm1057, %v1041, %v1121
    %v1138 = vsel %vm1058, %v1042, %v1122
    %v1139 = vsel %vm1059, %v1043, %v1123
    %v1140 = vsel %vm1060, %v1044, %v1124
    %v1141 = vsel %vm1061, %v1045, %v1125
    %v1142 = vsel %vm1062, %v1046, %v1126
    %v1143 = vsel %vm1063, %v1047, %v1127
    %1144 = vst [vmem:[%s3] sm:$0xff] %v1128
    %1145 = vst [vmem:[%s3 + $0x8] sm:$0xff] %v1129
    %1146 = vst [vmem:[%s3 + $0x10] sm:$0xff] %v1130
    %1147 = vst [vmem:[%s3 + $0x18] sm:$0xff] %v1131
    %1148 = vst [vmem:[%s3 + $0x20] sm:$0xff] %v1132
    %1149 = vst [vmem:[%s3 + $0x28] sm:$0xff] %v1133
    %1150 = vst [vmem:[%s3 + $0x30] sm:$0xff] %v1134
    %1151 = vst [vmem:[%s3 + $0x38] sm:$0xff] %v1135
    %1152 = vst [vmem:[%s3 + $0x40] sm:$0xff] %v1136
    %1153 = vst [vmem:[%s3 + $0x48] sm:$0xff] %v1137
    %1154 = vst [vmem:[%s3 + $0x50] sm:$0xff] %v1138
    %1155 = vst [vmem:[%s3 + $0x58] sm:$0xff] %v1139
    %1156 = vst [vmem:[%s3 + $0x60] sm:$0xff] %v1140
    %1157 = vst [vmem:[%s3 + $0x68] sm:$0xff] %v1141
    %1158 = vst [vmem:[%s3 + $0x70] sm:$0xff] %v1142
    %1159 = vst [vmem:[%s3 + $0x78] sm:$0xff] %v1143
  $region21: #{graph_attention_layer.3} parent=0 // pred_fallthru
    _
  // Predicated region
  $region22: #{graph_attention_layer.3} parent=0 // pred_check
    _
  $region23: #{graph_attention_layer.3} parent=0 // pred_check_branch
    %1161 = sbr.rel (0) target = $region25
  $region24: #{graph_attention_layer.3} parent=0 // pred_region
    _
  $region25: #{graph_attention_layer.3} parent=0 // pred_fallthru
    _
  // Predicated region
  $region26: #{graph_attention_layer.3} parent=0 // pred_check
    _
  $region27: #{graph_attention_layer.3} parent=0 // pred_check_branch
    %1163 = sbr.rel (0) target = $region29
  $region28: #{graph_attention_layer.3} parent=0 // pred_region
    _
  $region29: #{graph_attention_layer.3} parent=0 // pred_fallthru
    _

</llo_original>
